<compile_context>
chip_gen: v7x
topology: tpu7x:2x2x1
jax: 0.10.0
libtpu: 0.0.40
codegen_flags: <defaults>
</compile_context>

<pallas_src>
import jax
import jax.numpy as jnp
from jax.experimental import pallas as pl
from jax.experimental.pallas import tpu as pltpu


# --------------------------------------------------------------------------
# Kernel 1: per-batch-tile modality MLP projections (grid over batch tiles,
#           all three modalities handled per step; batch axis is "parallel").
# --------------------------------------------------------------------------
def _project_kernel(img_tok_ref, pose_tok_ref, txt_tok_ref,
                    w1_ref, b1_ref, w2_ref, b2_ref, w3_ref, b3_ref,
                    img_out_ref, pose_out_ref, txt_out_ref):
    inv_t = 1.0 / img_tok_ref.shape[1]

    def project(tok_ref, m):
        # Token mean-pool accumulated in f32 (tokens arrive bf16: HBM traffic
        # halved), then bf16 operands into the MXU with f32 accumulation.
        pooled = (jnp.sum(tok_ref[...].astype(jnp.float32), axis=1)
                  * inv_t).astype(jnp.bfloat16)                          # (TB, D)
        h1 = jnp.dot(pooled, w1_ref[m], preferred_element_type=jnp.float32)
        h1 = jnp.maximum(h1 + b1_ref[m], 0.0).astype(jnp.bfloat16)       # (TB, H1p)
        h2 = jnp.dot(h1, w2_ref[m], preferred_element_type=jnp.float32)
        h2 = jnp.maximum(h2 + b2_ref[m], 0.0).astype(jnp.bfloat16)       # (TB, H2p)
        emb = jnp.dot(h2, w3_ref[m], preferred_element_type=jnp.float32)
        return (emb + b3_ref[m]).astype(jnp.bfloat16)                    # (TB, D)

    img_out_ref[...] = project(img_tok_ref, 0)
    pose_out_ref[...] = project(pose_tok_ref, 1)
    txt_out_ref[...] = project(txt_tok_ref, 2)


# --------------------------------------------------------------------------
# Kernel 2: pairwise symBBC losses on the bf16 embeddings.
#   Row-blocked score matrix, single exp pass per pair; column logsumexp is
#   maintained online (rescaled running accumulator), so live intermediates
#   are bounded to (row_blk, B) regardless of batch size.
# --------------------------------------------------------------------------
def _make_symbbc_kernel(row_blk):
    def kernel(temp_ref, img_ref, pose_ref, txt_ref, loss_ref):
        temp = temp_ref[0, 0]
        n = img_ref.shape[0]
        n_blk = n // row_blk

        def symbbc(ea_ref, eb_ref):
            eb = eb_ref[...]                                             # (B, D) bf16
            # Diagonal from the *same* bf16 values the MXU sees -> consistent
            # with s[i, i] (the temperature is applied to both identically).
            diag_sum = jnp.sum(ea_ref[...].astype(jnp.float32)
                               * eb.astype(jnp.float32)) * temp

            def body(i, carry):
                lse_row_sum, g, col_acc = carry
                off = pl.multiple_of(i * row_blk, row_blk)
                ea_blk = ea_ref[pl.ds(off, row_blk), :]                  # (rb, D) bf16
                s = jax.lax.dot_general(
                    ea_blk, eb, (((1,), (1,)), ((), ())),
                    preferred_element_type=jnp.float32) * temp           # (rb, B)
                m_row = jnp.max(s, axis=1, keepdims=True)                # (rb, 1)
                p = jnp.exp(s - m_row)                                   # single exp pass
                lse_row_sum = lse_row_sum + jnp.sum(
                    m_row + jnp.log(jnp.sum(p, axis=1, keepdims=True)))
                # online column logsumexp: rescale running accumulator to the
                # new global max and fold this block in (reuses p, no 2nd exp
                # over the full (rb, B) tile).
                g_new = jnp.maximum(g, jnp.max(m_row))
                col_acc = (col_acc * jnp.exp(g - g_new)
                           + jnp.sum(p * jnp.exp(m_row - g_new),
                                     axis=0, keepdims=True))             # (1, B)
                return lse_row_sum, g_new, col_acc

            init = (jnp.zeros((), jnp.float32),
                    jnp.full((), -1e30, jnp.float32),
                    jnp.zeros((1, n), jnp.float32))
            lse_row_sum, g, col_acc = jax.lax.fori_loop(0, n_blk, body, init)
            lse_col_sum = jnp.sum(g + jnp.log(col_acc))
            return (0.5 * (lse_row_sum + lse_col_sum) - diag_sum) / n

        loss_ref[0, 0] = symbbc(img_ref, pose_ref)
        loss_ref[0, 1] = symbbc(img_ref, txt_ref)
        loss_ref[0, 2] = symbbc(pose_ref, txt_ref)

    return kernel


# --------------------------------------------------------------------------
# Host-side helpers
# --------------------------------------------------------------------------
def _pad_lanes(x, axis):
    """Zero-pad `axis` of x up to a multiple of 128 (numerically exact for
    ReLU-MLP weights/biases)."""
    pad = (-x.shape[axis]) % 128
    if pad == 0:
        return x
    widths = [(0, 0)] * x.ndim
    widths[axis] = (0, pad)
    return jnp.pad(x, widths)


def _vmem_capacity_bytes():
    try:
        info = pltpu.get_tpu_info()
        cap = getattr(info, "vmem_capacity_bytes", None)
        if cap:
            return int(cap)
    except Exception:
        pass
    return 64 * 1024 * 1024      # conservative fallback (v7x per-core VMEM)


def _pick_batch_tile(B, T, D, tok_itemsize, H1p, H2p, budget):
    """Largest batch tile whose real footprint fits the VMEM budget:
    double-buffered token tiles (3 modalities) + f32 pooling transient +
    double-buffered bf16 embedding output tiles + stacked weights."""
    w_bytes = 2 * 3 * ((D * H1p + H1p * H2p + H2p * D) * 2 + (H1p + H2p + D) * 4)

    def fits(tb):
        tok = 3 * 2 * tb * T * D * tok_itemsize
        pool = tb * T * D * 4
        out = 3 * 2 * tb * D * 2
        return tok + pool + out + w_bytes <= budget

    if B % 8 != 0:
        if not fits(B):
            raise ValueError("batch not divisible by 8 and full-batch block "
                             "does not fit the VMEM budget")
        return B
    for tb in (512, 256, 128, 64, 32, 16, 8):
        if B % tb == 0 and fits(tb):
            return tb
    raise ValueError("token tile does not fit in VMEM even at batch_tile=8")


def _pick_row_block(B):
    for rb in (512, 256, 128, 64, 32, 16, 8):
        if B % rb == 0:
            return rb
    return B


def aligner_forward(image_tokens, pose_tokens, text_tokens, params, temperature,
                    batch_tile=None, row_block=None):
    """Aligner.forward: 3 modality MLP projections (one pallas_call, batch axis
    parallel, bf16 tokens/embeddings) + 3 pairwise symBBC losses (tiny second
    pallas_call with row-blocked online logsumexp)."""
    B, T, D = image_tokens.shape
    assert pose_tokens.shape == (B, T, D) and text_tokens.shape == (B, T, D)

    def prep(p):
        w1, b1, w2, b2, w3, b3 = p
        w1 = _pad_lanes(w1.astype(jnp.bfloat16), axis=1)
        b1 = _pad_lanes(b1.astype(jnp.float32).reshape(1, -1), axis=1)
        w2 = _pad_lanes(_pad_lanes(w2.astype(jnp.bfloat16), axis=0), axis=1)
        b2 = _pad_lanes(b2.astype(jnp.float32).reshape(1, -1), axis=1)
        w3 = _pad_lanes(w3.astype(jnp.bfloat16), axis=0)
        b3 = b3.astype(jnp.float32).reshape(1, -1)
        return w1, b1, w2, b2, w3, b3

    prepped = [prep(params[k]) for k in ("image", "pose", "text")]
    # Weights are tiny: stacking them per layer across the 3 modalities is free.
    w1s, b1s, w2s, b2s, w3s, b3s = [jnp.stack([m[i] for m in prepped])
                                    for i in range(6)]
    H1p, H2p = w1s.shape[-1], w2s.shape[-1]

    cap = _vmem_capacity_bytes()
    vmem_limit = int(cap * 0.85)      # ~54 MiB on v7x, ~108 MiB on v5e/v6e
    budget = int(cap * 0.70)

    tok_itemsize = jnp.dtype(image_tokens.dtype).itemsize
    if batch_tile is None:
        batch_tile = _pick_batch_tile(B, T, D, tok_itemsize, H1p, H2p, budget)
    assert B % batch_tile == 0
    nb = B // batch_tile
    if nb > 1:
        assert batch_tile % 8 == 0, "batch tiles must be sublane (8) aligned"
    TB = batch_tile

    emb_shape = jax.ShapeDtypeStruct((B, D), jnp.bfloat16)
    img_emb, pose_emb, txt_emb = pl.pallas_call(
        _project_kernel,
        out_shape=(emb_shape, emb_shape, emb_shape),
        grid_spec=pltpu.PrefetchScalarGridSpec(
            num_scalar_prefetch=0,
            grid=(nb,),
            in_specs=[
                pl.BlockSpec((TB, T, D), lambda b: (b, 0, 0)),
                pl.BlockSpec((TB, T, D), lambda b: (b, 0, 0)),
                pl.BlockSpec((TB, T, D), lambda b: (b, 0, 0)),
                pl.BlockSpec((3, D, H1p), lambda b: (0, 0, 0)),
                pl.BlockSpec((3, 1, H1p), lambda b: (0, 0, 0)),
                pl.BlockSpec((3, H1p, H2p), lambda b: (0, 0, 0)),
                pl.BlockSpec((3, 1, H2p), lambda b: (0, 0, 0)),
                pl.BlockSpec((3, H2p, D), lambda b: (0, 0, 0)),
                pl.BlockSpec((3, 1, D), lambda b: (0, 0, 0)),
            ],
            out_specs=[
                pl.BlockSpec((TB, D), lambda b: (b, 0)),
                pl.BlockSpec((TB, D), lambda b: (b, 0)),
                pl.BlockSpec((TB, D), lambda b: (b, 0)),
            ],
        ),
        compiler_params=pltpu.CompilerParams(
            dimension_semantics=("parallel",),        # usable by both v7x TCs
            vmem_limit_bytes=vmem_limit,
        ),
    )(image_tokens, pose_tokens, text_tokens, w1s, b1s, w2s, b2s, w3s, b3s)

    if row_block is None:
        row_block = _pick_row_block(B)
    assert B % row_block == 0

    temp_arr = jnp.asarray(temperature, jnp.float32).reshape(1, 1)

    losses = pl.pallas_call(
        _make_symbbc_kernel(row_block),
        out_shape=jax.ShapeDtypeStruct((1, 3), jnp.float32),
        grid_spec=pltpu.PrefetchScalarGridSpec(
            num_scalar_prefetch=0,
            grid=(1,),
            in_specs=[
                pl.BlockSpec(memory_space=pltpu.MemorySpace.SMEM),   # temperature
                pl.BlockSpec((B, D), lambda i: (0, 0)),
                pl.BlockSpec((B, D), lambda i: (0, 0)),
                pl.BlockSpec((B, D), lambda i: (0, 0)),
            ],
            out_specs=pl.BlockSpec(memory_space=pltpu.MemorySpace.SMEM),
        ),
        compiler_params=pltpu.CompilerParams(
            dimension_semantics=("arbitrary",),
            vmem_limit_bytes=vmem_limit,
        ),
    )(temp_arr, img_emb, pose_emb, txt_emb)

    return {"image_pose": losses[0, 0],
            "image_text": losses[0, 1],
            "pose_text": losses[0, 2]}


# --------------------------------------------------------------------------
# Pure-JAX reference (f32) of the same forward, for a correctness check.
# --------------------------------------------------------------------------
def _reference_forward(image_tokens, pose_tokens, text_tokens, params, temperature):
    def mlp(x, p):
        w1, b1, w2, b2, w3, b3 = p
        pooled = jnp.mean(x, axis=1)
        h1 = jax.nn.relu(pooled @ w1 + b1)
        h2 = jax.nn.relu(h1 @ w2 + b2)
        return h2 @ w3 + b3

    def symbbc(ea, eb):
        s = (ea @ eb.T) * temperature
        idx = jnp.arange(s.shape[0])
        ce_r = -jnp.mean(jax.nn.log_softmax(s, axis=1)[idx, idx])
        ce_c = -jnp.mean(jax.nn.log_softmax(s.T, axis=1)[idx, idx])
        return 0.5 * (ce_r + ce_c)

    ie = mlp(image_tokens, params["image"])
    pe = mlp(pose_tokens, params["pose"])
    te = mlp(text_tokens, params["text"])
    return {"image_pose": symbbc(ie, pe),
            "image_text": symbbc(ie, te),
            "pose_text": symbbc(pe, te)}


def _init_mlp_params(key, d, h1, h2):
    ks = jax.random.split(key, 6)

    def bf16_exact(x):   # kernel uses bf16 weights; keep the test exact
        return x.astype(jnp.bfloat16).astype(jnp.float32)

    w1 = bf16_exact(0.5 * jax.random.normal(ks[0], (d, h1), jnp.float32) / jnp.sqrt(d))
    b1 = 0.1 * jax.random.normal(ks[1], (1, h1), jnp.float32)
    w2 = bf16_exact(0.5 * jax.random.normal(ks[2], (h1, h2), jnp.float32) / jnp.sqrt(h1))
    b2 = 0.1 * jax.random.normal(ks[3], (1, h2), jnp.float32)
    w3 = bf16_exact(0.5 * jax.random.normal(ks[4], (h2, d), jnp.float32) / jnp.sqrt(h2))
    b3 = 0.1 * jax.random.normal(ks[5], (1, d), jnp.float32)
    return (w1, b1, w2, b2, w3, b3)


if __name__ == "__main__":
    # small shapes: batch=32, tokens=8, latentD=128 (stand-in for 512)
    B, T, D = 32, 8, 128
    H1, H2 = D // 2, D // 4

    key = jax.random.PRNGKey(0)
    k_img, k_pose, k_txt, k_pi, k_pp, k_pt = jax.random.split(key, 6)

    # synthetic frozen-backbone token features, bf16 as the backbones would emit
    image_tokens = jax.random.normal(k_img, (B, T, D), jnp.float32).astype(jnp.bfloat16)
    pose_tokens = jax.random.normal(k_pose, (B, T, D), jnp.float32).astype(jnp.bfloat16)
    text_tokens = jax.random.normal(k_txt, (B, T, D), jnp.float32).astype(jnp.bfloat16)

    params = {
        "image": _init_mlp_params(k_pi, D, H1, H2),
        "pose": _init_mlp_params(k_pp, D, H1, H2),
        "text": _init_mlp_params(k_pt, D, H1, H2),
    }
    # self.temperature = nn.Parameter(torch.FloatTensor((10,))) -> value 10.0
    temperature = jnp.float32(10.0)

    # batch_tile=16 -> grid=(2,) projection pipeline; row_block=16 -> two-step
    # online column-logsumexp path in the epilogue.
    loss_dict = aligner_forward(image_tokens, pose_tokens, text_tokens,
                                params, temperature,
                                batch_tile=16, row_block=16)
    loss_dict = jax.block_until_ready(loss_dict)

    ref = _reference_forward(image_tokens.astype(jnp.float32),
                             pose_tokens.astype(jnp.float32),
                             text_tokens.astype(jnp.float32),
                             params, temperature)
    for k in loss_dict:
        v, r = loss_dict[k], ref[k]
        assert jnp.isfinite(v), f"non-finite loss for {k}"
        assert jnp.allclose(v, r, rtol=2e-2, atol=5e-2), (k, float(v), float(r))
    print("KERNEL_OK")
</pallas_src>

<mosaic_0001>
module attributes {stable_mosaic.version = 11 : i64} {
  func.func @_project_kernel(%arg0: i32, %arg1: memref<16x8x128xbf16, #tpu.memory_space<vmem>>, %arg2: memref<16x8x128xbf16, #tpu.memory_space<vmem>>, %arg3: memref<16x8x128xbf16, #tpu.memory_space<vmem>>, %arg4: memref<3x128x128xbf16, #tpu.memory_space<vmem>>, %arg5: memref<3x1x128xf32, #tpu.memory_space<vmem>>, %arg6: memref<3x128x128xbf16, #tpu.memory_space<vmem>>, %arg7: memref<3x1x128xf32, #tpu.memory_space<vmem>>, %arg8: memref<3x128x128xbf16, #tpu.memory_space<vmem>>, %arg9: memref<3x1x128xf32, #tpu.memory_space<vmem>>, %arg10: memref<16x128xbf16, #tpu.memory_space<vmem>>, %arg11: memref<16x128xbf16, #tpu.memory_space<vmem>>, %arg12: memref<16x128xbf16, #tpu.memory_space<vmem>>) attributes {dimension_semantics = [#tpu.dimension_semantics<parallel>], iteration_bounds = array<i64: 2>, scalar_prefetch = 0 : i64, scratch_operands = 0 : i64, tpu.core_type = #tpu.core_type<tc>, window_params = [{transform_indices = @transform_0, window_bounds = array<i64: 16, 8, 128>}, {transform_indices = @transform_1, window_bounds = array<i64: 16, 8, 128>}, {transform_indices = @transform_2, window_bounds = array<i64: 16, 8, 128>}, {pipeline_mode = #tpu.pipeline_mode<synchronous>, transform_indices = @transform_3, window_bounds = array<i64: 3, 128, 128>}, {pipeline_mode = #tpu.pipeline_mode<synchronous>, transform_indices = @transform_4, window_bounds = array<i64: 3, 1, 128>}, {pipeline_mode = #tpu.pipeline_mode<synchronous>, transform_indices = @transform_5, window_bounds = array<i64: 3, 128, 128>}, {pipeline_mode = #tpu.pipeline_mode<synchronous>, transform_indices = @transform_6, window_bounds = array<i64: 3, 1, 128>}, {pipeline_mode = #tpu.pipeline_mode<synchronous>, transform_indices = @transform_7, window_bounds = array<i64: 3, 128, 128>}, {pipeline_mode = #tpu.pipeline_mode<synchronous>, transform_indices = @transform_8, window_bounds = array<i64: 3, 1, 128>}, {transform_indices = @transform_9, window_bounds = array<i64: 16, 128>}, {transform_indices = @transform_10, window_bounds = array<i64: 16, 128>}, {transform_indices = @transform_11, window_bounds = array<i64: 16, 128>}]} {
    %c0 = arith.constant 0 : index
    %c0_0 = arith.constant 0 : index
    %c0_1 = arith.constant 0 : index
    %0 = vector.load %arg1[%c0, %c0_0, %c0_1] : memref<16x8x128xbf16, #tpu.memory_space<vmem>>, vector<16x8x128xbf16>
    %1 = arith.extf %0 : vector<16x8x128xbf16> to vector<16x8x128xf32>
    %cst = arith.constant dense<0.000000e+00> : vector<16x128xf32>
    %2 = vector.multi_reduction <add>, %1, %cst [1] : vector<16x8x128xf32> to vector<16x128xf32>
    %cst_2 = arith.constant 1.250000e-01 : f32
    %3 = vector.broadcast %cst_2 : f32 to vector<16x128xf32>
    %4 = arith.mulf %2, %3 : vector<16x128xf32>
    %5 = arith.truncf %4 : vector<16x128xf32> to vector<16x128xbf16>
    %c0_3 = arith.constant 0 : index
    %c0_4 = arith.constant 0 : index
    %c0_5 = arith.constant 0 : index
    %6 = vector.load %arg4[%c0_3, %c0_4, %c0_5] : memref<3x128x128xbf16, #tpu.memory_space<vmem>>, vector<1x128x128xbf16>
    %7 = vector.shape_cast %6 : vector<1x128x128xbf16> to vector<128x128xbf16>
    %cst_6 = arith.constant dense<0.000000e+00> : vector<16x128xf32>
    %8 = tpu.matmul %5, %7, %cst_6 {dimension_numbers = #tpu.dot_dimension_numbers<[1], [0], [0], [1], [0, 0, 1, 1], [], []>} : vector<16x128xbf16>, vector<128x128xbf16>, vector<16x128xf32> -> vector<16x128xf32>
    %c0_7 = arith.constant 0 : index
    %c0_8 = arith.constant 0 : index
    %c0_9 = arith.constant 0 : index
    %9 = vector.load %arg5[%c0_7, %c0_8, %c0_9] : memref<3x1x128xf32, #tpu.memory_space<vmem>>, vector<1x1x128xf32>
    %10 = vector.shape_cast %9 : vector<1x1x128xf32> to vector<1x128xf32>
    %11 = vector.broadcast %10 : vector<1x128xf32> to vector<16x128xf32>
    %12 = arith.addf %8, %11 : vector<16x128xf32>
    %cst_10 = arith.constant 0.000000e+00 : f32
    %13 = vector.broadcast %cst_10 : f32 to vector<16x128xf32>
    %14 = arith.maximumf %12, %13 : vector<16x128xf32>
    %15 = arith.truncf %14 : vector<16x128xf32> to vector<16x128xbf16>
    %c0_11 = arith.constant 0 : index
    %c0_12 = arith.constant 0 : index
    %c0_13 = arith.constant 0 : index
    %16 = vector.load %arg6[%c0_11, %c0_12, %c0_13] : memref<3x128x128xbf16, #tpu.memory_space<vmem>>, vector<1x128x128xbf16>
    %17 = vector.shape_cast %16 : vector<1x128x128xbf16> to vector<128x128xbf16>
    %cst_14 = arith.constant dense<0.000000e+00> : vector<16x128xf32>
    %18 = tpu.matmul %15, %17, %cst_14 {dimension_numbers = #tpu.dot_dimension_numbers<[1], [0], [0], [1], [0, 0, 1, 1], [], []>} : vector<16x128xbf16>, vector<128x128xbf16>, vector<16x128xf32> -> vector<16x128xf32>
    %c0_15 = arith.constant 0 : index
    %c0_16 = arith.constant 0 : index
    %c0_17 = arith.constant 0 : index
    %19 = vector.load %arg7[%c0_15, %c0_16, %c0_17] : memref<3x1x128xf32, #tpu.memory_space<vmem>>, vector<1x1x128xf32>
    %20 = vector.shape_cast %19 : vector<1x1x128xf32> to vector<1x128xf32>
    %21 = vector.broadcast %20 : vector<1x128xf32> to vector<16x128xf32>
    %22 = arith.addf %18, %21 : vector<16x128xf32>
    %cst_18 = arith.constant 0.000000e+00 : f32
    %23 = vector.broadcast %cst_18 : f32 to vector<16x128xf32>
    %24 = arith.maximumf %22, %23 : vector<16x128xf32>
    %25 = arith.truncf %24 : vector<16x128xf32> to vector<16x128xbf16>
    %c0_19 = arith.constant 0 : index
    %c0_20 = arith.constant 0 : index
    %c0_21 = arith.constant 0 : index
    %26 = vector.load %arg8[%c0_19, %c0_20, %c0_21] : memref<3x128x128xbf16, #tpu.memory_space<vmem>>, vector<1x128x128xbf16>
    %27 = vector.shape_cast %26 : vector<1x128x128xbf16> to vector<128x128xbf16>
    %cst_22 = arith.constant dense<0.000000e+00> : vector<16x128xf32>
    %28 = tpu.matmul %25, %27, %cst_22 {dimension_numbers = #tpu.dot_dimension_numbers<[1], [0], [0], [1], [0, 0, 1, 1], [], []>} : vector<16x128xbf16>, vector<128x128xbf16>, vector<16x128xf32> -> vector<16x128xf32>
    %c0_23 = arith.constant 0 : index
    %c0_24 = arith.constant 0 : index
    %c0_25 = arith.constant 0 : index
    %29 = vector.load %arg9[%c0_23, %c0_24, %c0_25] : memref<3x1x128xf32, #tpu.memory_space<vmem>>, vector<1x1x128xf32>
    %30 = vector.shape_cast %29 : vector<1x1x128xf32> to vector<1x128xf32>
    %31 = vector.broadcast %30 : vector<1x128xf32> to vector<16x128xf32>
    %32 = arith.addf %28, %31 : vector<16x128xf32>
    %33 = arith.truncf %32 : vector<16x128xf32> to vector<16x128xbf16>
    %c0_26 = arith.constant 0 : index
    %c0_27 = arith.constant 0 : index
    %34 = vector.load %arg10[%c0_26, %c0_27] : memref<16x128xbf16, #tpu.memory_space<vmem>>, vector<16x128xbf16>
    tpu.vector_store %arg10[%c0_26, %c0_27], %33 {strides = array<i32>} : memref<16x128xbf16, #tpu.memory_space<vmem>>, vector<16x128xbf16>,
    %c0_28 = arith.constant 0 : index
    %c0_29 = arith.constant 0 : index
    %c0_30 = arith.constant 0 : index
    %35 = vector.load %arg2[%c0_28, %c0_29, %c0_30] : memref<16x8x128xbf16, #tpu.memory_space<vmem>>, vector<16x8x128xbf16>
    %36 = arith.extf %35 : vector<16x8x128xbf16> to vector<16x8x128xf32>
    %cst_31 = arith.constant dense<0.000000e+00> : vector<16x128xf32>
    %37 = vector.multi_reduction <add>, %36, %cst_31 [1] : vector<16x8x128xf32> to vector<16x128xf32>
    %cst_32 = arith.constant 1.250000e-01 : f32
    %38 = vector.broadcast %cst_32 : f32 to vector<16x128xf32>
    %39 = arith.mulf %37, %38 : vector<16x128xf32>
    %40 = arith.truncf %39 : vector<16x128xf32> to vector<16x128xbf16>
    %c1 = arith.constant 1 : index
    %c0_33 = arith.constant 0 : index
    %c0_34 = arith.constant 0 : index
    %41 = vector.load %arg4[%c1, %c0_33, %c0_34] : memref<3x128x128xbf16, #tpu.memory_space<vmem>>, vector<1x128x128xbf16>
    %42 = vector.shape_cast %41 : vector<1x128x128xbf16> to vector<128x128xbf16>
    %cst_35 = arith.constant dense<0.000000e+00> : vector<16x128xf32>
    %43 = tpu.matmul %40, %42, %cst_35 {dimension_numbers = #tpu.dot_dimension_numbers<[1], [0], [0], [1], [0, 0, 1, 1], [], []>} : vector<16x128xbf16>, vector<128x128xbf16>, vector<16x128xf32> -> vector<16x128xf32>
    %c1_36 = arith.constant 1 : index
    %c0_37 = arith.constant 0 : index
    %c0_38 = arith.constant 0 : index
    %44 = vector.load %arg5[%c1_36, %c0_37, %c0_38] : memref<3x1x128xf32, #tpu.memory_space<vmem>>, vector<1x1x128xf32>
    %45 = vector.shape_cast %44 : vector<1x1x128xf32> to vector<1x128xf32>
    %46 = vector.broadcast %45 : vector<1x128xf32> to vector<16x128xf32>
    %47 = arith.addf %43, %46 : vector<16x128xf32>
    %cst_39 = arith.constant 0.000000e+00 : f32
    %48 = vector.broadcast %cst_39 : f32 to vector<16x128xf32>
    %49 = arith.maximumf %47, %48 : vector<16x128xf32>
    %50 = arith.truncf %49 : vector<16x128xf32> to vector<16x128xbf16>
    %c1_40 = arith.constant 1 : index
    %c0_41 = arith.constant 0 : index
    %c0_42 = arith.constant 0 : index
    %51 = vector.load %arg6[%c1_40, %c0_41, %c0_42] : memref<3x128x128xbf16, #tpu.memory_space<vmem>>, vector<1x128x128xbf16>
    %52 = vector.shape_cast %51 : vector<1x128x128xbf16> to vector<128x128xbf16>
    %cst_43 = arith.constant dense<0.000000e+00> : vector<16x128xf32>
    %53 = tpu.matmul %50, %52, %cst_43 {dimension_numbers = #tpu.dot_dimension_numbers<[1], [0], [0], [1], [0, 0, 1, 1], [], []>} : vector<16x128xbf16>, vector<128x128xbf16>, vector<16x128xf32> -> vector<16x128xf32>
    %c1_44 = arith.constant 1 : index
    %c0_45 = arith.constant 0 : index
    %c0_46 = arith.constant 0 : index
    %54 = vector.load %arg7[%c1_44, %c0_45, %c0_46] : memref<3x1x128xf32, #tpu.memory_space<vmem>>, vector<1x1x128xf32>
    %55 = vector.shape_cast %54 : vector<1x1x128xf32> to vector<1x128xf32>
    %56 = vector.broadcast %55 : vector<1x128xf32> to vector<16x128xf32>
    %57 = arith.addf %53, %56 : vector<16x128xf32>
    %cst_47 = arith.constant 0.000000e+00 : f32
    %58 = vector.broadcast %cst_47 : f32 to vector<16x128xf32>
    %59 = arith.maximumf %57, %58 : vector<16x128xf32>
    %60 = arith.truncf %59 : vector<16x128xf32> to vector<16x128xbf16>
    %c1_48 = arith.constant 1 : index
    %c0_49 = arith.constant 0 : index
    %c0_50 = arith.constant 0 : index
    %61 = vector.load %arg8[%c1_48, %c0_49, %c0_50] : memref<3x128x128xbf16, #tpu.memory_space<vmem>>, vector<1x128x128xbf16>
    %62 = vector.shape_cast %61 : vector<1x128x128xbf16> to vector<128x128xbf16>
    %cst_51 = arith.constant dense<0.000000e+00> : vector<16x128xf32>
    %63 = tpu.matmul %60, %62, %cst_51 {dimension_numbers = #tpu.dot_dimension_numbers<[1], [0], [0], [1], [0, 0, 1, 1], [], []>} : vector<16x128xbf16>, vector<128x128xbf16>, vector<16x128xf32> -> vector<16x128xf32>
    %c1_52 = arith.constant 1 : index
    %c0_53 = arith.constant 0 : index
    %c0_54 = arith.constant 0 : index
    %64 = vector.load %arg9[%c1_52, %c0_53, %c0_54] : memref<3x1x128xf32, #tpu.memory_space<vmem>>, vector<1x1x128xf32>
    %65 = vector.shape_cast %64 : vector<1x1x128xf32> to vector<1x128xf32>
    %66 = vector.broadcast %65 : vector<1x128xf32> to vector<16x128xf32>
    %67 = arith.addf %63, %66 : vector<16x128xf32>
    %68 = arith.truncf %67 : vector<16x128xf32> to vector<16x128xbf16>
    %c0_55 = arith.constant 0 : index
    %c0_56 = arith.constant 0 : index
    %69 = vector.load %arg11[%c0_55, %c0_56] : memref<16x128xbf16, #tpu.memory_space<vmem>>, vector<16x128xbf16>
    tpu.vector_store %arg11[%c0_55, %c0_56], %68 {strides = array<i32>} : memref<16x128xbf16, #tpu.memory_space<vmem>>, vector<16x128xbf16>,
    %c0_57 = arith.constant 0 : index
    %c0_58 = arith.constant 0 : index
    %c0_59 = arith.constant 0 : index
    %70 = vector.load %arg3[%c0_57, %c0_58, %c0_59] : memref<16x8x128xbf16, #tpu.memory_space<vmem>>, vector<16x8x128xbf16>
    %71 = arith.extf %70 : vector<16x8x128xbf16> to vector<16x8x128xf32>
    %cst_60 = arith.constant dense<0.000000e+00> : vector<16x128xf32>
    %72 = vector.multi_reduction <add>, %71, %cst_60 [1] : vector<16x8x128xf32> to vector<16x128xf32>
    %cst_61 = arith.constant 1.250000e-01 : f32
    %73 = vector.broadcast %cst_61 : f32 to vector<16x128xf32>
    %74 = arith.mulf %72, %73 : vector<16x128xf32>
    %75 = arith.truncf %74 : vector<16x128xf32> to vector<16x128xbf16>
    %c2 = arith.constant 2 : index
    %c0_62 = arith.constant 0 : index
    %c0_63 = arith.constant 0 : index
    %76 = vector.load %arg4[%c2, %c0_62, %c0_63] : memref<3x128x128xbf16, #tpu.memory_space<vmem>>, vector<1x128x128xbf16>
    %77 = vector.shape_cast %76 : vector<1x128x128xbf16> to vector<128x128xbf16>
    %cst_64 = arith.constant dense<0.000000e+00> : vector<16x128xf32>
    %78 = tpu.matmul %75, %77, %cst_64 {dimension_numbers = #tpu.dot_dimension_numbers<[1], [0], [0], [1], [0, 0, 1, 1], [], []>} : vector<16x128xbf16>, vector<128x128xbf16>, vector<16x128xf32> -> vector<16x128xf32>
    %c2_65 = arith.constant 2 : index
    %c0_66 = arith.constant 0 : index
    %c0_67 = arith.constant 0 : index
    %79 = vector.load %arg5[%c2_65, %c0_66, %c0_67] : memref<3x1x128xf32, #tpu.memory_space<vmem>>, vector<1x1x128xf32>
    %80 = vector.shape_cast %79 : vector<1x1x128xf32> to vector<1x128xf32>
    %81 = vector.broadcast %80 : vector<1x128xf32> to vector<16x128xf32>
    %82 = arith.addf %78, %81 : vector<16x128xf32>
    %cst_68 = arith.constant 0.000000e+00 : f32
    %83 = vector.broadcast %cst_68 : f32 to vector<16x128xf32>
    %84 = arith.maximumf %82, %83 : vector<16x128xf32>
    %85 = arith.truncf %84 : vector<16x128xf32> to vector<16x128xbf16>
    %c2_69 = arith.constant 2 : index
    %c0_70 = arith.constant 0 : index
    %c0_71 = arith.constant 0 : index
    %86 = vector.load %arg6[%c2_69, %c0_70, %c0_71] : memref<3x128x128xbf16, #tpu.memory_space<vmem>>, vector<1x128x128xbf16>
    %87 = vector.shape_cast %86 : vector<1x128x128xbf16> to vector<128x128xbf16>
    %cst_72 = arith.constant dense<0.000000e+00> : vector<16x128xf32>
    %88 = tpu.matmul %85, %87, %cst_72 {dimension_numbers = #tpu.dot_dimension_numbers<[1], [0], [0], [1], [0, 0, 1, 1], [], []>} : vector<16x128xbf16>, vector<128x128xbf16>, vector<16x128xf32> -> vector<16x128xf32>
    %c2_73 = arith.constant 2 : index
    %c0_74 = arith.constant 0 : index
    %c0_75 = arith.constant 0 : index
    %89 = vector.load %arg7[%c2_73, %c0_74, %c0_75] : memref<3x1x128xf32, #tpu.memory_space<vmem>>, vector<1x1x128xf32>
    %90 = vector.shape_cast %89 : vector<1x1x128xf32> to vector<1x128xf32>
    %91 = vector.broadcast %90 : vector<1x128xf32> to vector<16x128xf32>
    %92 = arith.addf %88, %91 : vector<16x128xf32>
    %cst_76 = arith.constant 0.000000e+00 : f32
    %93 = vector.broadcast %cst_76 : f32 to vector<16x128xf32>
    %94 = arith.maximumf %92, %93 : vector<16x128xf32>
    %95 = arith.truncf %94 : vector<16x128xf32> to vector<16x128xbf16>
    %c2_77 = arith.constant 2 : index
    %c0_78 = arith.constant 0 : index
    %c0_79 = arith.constant 0 : index
    %96 = vector.load %arg8[%c2_77, %c0_78, %c0_79] : memref<3x128x128xbf16, #tpu.memory_space<vmem>>, vector<1x128x128xbf16>
    %97 = vector.shape_cast %96 : vector<1x128x128xbf16> to vector<128x128xbf16>
    %cst_80 = arith.constant dense<0.000000e+00> : vector<16x128xf32>
    %98 = tpu.matmul %95, %97, %cst_80 {dimension_numbers = #tpu.dot_dimension_numbers<[1], [0], [0], [1], [0, 0, 1, 1], [], []>} : vector<16x128xbf16>, vector<128x128xbf16>, vector<16x128xf32> -> vector<16x128xf32>
    %c2_81 = arith.constant 2 : index
    %c0_82 = arith.constant 0 : index
    %c0_83 = arith.constant 0 : index
    %99 = vector.load %arg9[%c2_81, %c0_82, %c0_83] : memref<3x1x128xf32, #tpu.memory_space<vmem>>, vector<1x1x128xf32>
    %100 = vector.shape_cast %99 : vector<1x1x128xf32> to vector<1x128xf32>
    %101 = vector.broadcast %100 : vector<1x128xf32> to vector<16x128xf32>
    %102 = arith.addf %98, %101 : vector<16x128xf32>
    %103 = arith.truncf %102 : vector<16x128xf32> to vector<16x128xbf16>
    %c0_84 = arith.constant 0 : index
    %c0_85 = arith.constant 0 : index
    %104 = vector.load %arg12[%c0_84, %c0_85] : memref<16x128xbf16, #tpu.memory_space<vmem>>, vector<16x128xbf16>
    tpu.vector_store %arg12[%c0_84, %c0_85], %103 {strides = array<i32>} : memref<16x128xbf16, #tpu.memory_space<vmem>>, vector<16x128xbf16>,
    return
  }
  func.func @transform_0(%arg0: i32) -> (i32, i32, i32) {
    %c0_i32 = arith.constant 0 : i32
    %c0_i32_0 = arith.constant 0 : i32
    %c0_i32_1 = arith.constant 0 : i32
    return %arg0, %c0_i32, %c0_i32_0 : i32, i32, i32
  }
  func.func @transform_1(%arg0: i32) -> (i32, i32, i32) {
    %c0_i32 = arith.constant 0 : i32
    %c0_i32_0 = arith.constant 0 : i32
    %c0_i32_1 = arith.constant 0 : i32
    return %arg0, %c0_i32, %c0_i32_0 : i32, i32, i32
  }
  func.func @transform_2(%arg0: i32) -> (i32, i32, i32) {
    %c0_i32 = arith.constant 0 : i32
    %c0_i32_0 = arith.constant 0 : i32
    %c0_i32_1 = arith.constant 0 : i32
    return %arg0, %c0_i32, %c0_i32_0 : i32, i32, i32
  }
  func.func @transform_3(%arg0: i32) -> (i32, i32, i32) {
    %c0_i32 = arith.constant 0 : i32
    %c0_i32_0 = arith.constant 0 : i32
    %c0_i32_1 = arith.constant 0 : i32
    %c0_i32_2 = arith.constant 0 : i32
    return %c0_i32, %c0_i32_0, %c0_i32_1 : i32, i32, i32
  }
  func.func @transform_4(%arg0: i32) -> (i32, i32, i32) {
    %c0_i32 = arith.constant 0 : i32
    %c0_i32_0 = arith.constant 0 : i32
    %c0_i32_1 = arith.constant 0 : i32
    %c0_i32_2 = arith.constant 0 : i32
    return %c0_i32, %c0_i32_0, %c0_i32_1 : i32, i32, i32
  }
  func.func @transform_5(%arg0: i32) -> (i32, i32, i32) {
    %c0_i32 = arith.constant 0 : i32
    %c0_i32_0 = arith.constant 0 : i32
    %c0_i32_1 = arith.constant 0 : i32
    %c0_i32_2 = arith.constant 0 : i32
    return %c0_i32, %c0_i32_0, %c0_i32_1 : i32, i32, i32
  }
  func.func @transform_6(%arg0: i32) -> (i32, i32, i32) {
    %c0_i32 = arith.constant 0 : i32
    %c0_i32_0 = arith.constant 0 : i32
    %c0_i32_1 = arith.constant 0 : i32
    %c0_i32_2 = arith.constant 0 : i32
    return %c0_i32, %c0_i32_0, %c0_i32_1 : i32, i32, i32
  }
  func.func @transform_7(%arg0: i32) -> (i32, i32, i32) {
    %c0_i32 = arith.constant 0 : i32
    %c0_i32_0 = arith.constant 0 : i32
    %c0_i32_1 = arith.constant 0 : i32
    %c0_i32_2 = arith.constant 0 : i32
    return %c0_i32, %c0_i32_0, %c0_i32_1 : i32, i32, i32
  }
  func.func @transform_8(%arg0: i32) -> (i32, i32, i32) {
    %c0_i32 = arith.constant 0 : i32
    %c0_i32_0 = arith.constant 0 : i32
    %c0_i32_1 = arith.constant 0 : i32
    %c0_i32_2 = arith.constant 0 : i32
    return %c0_i32, %c0_i32_0, %c0_i32_1 : i32, i32, i32
  }
  func.func @transform_9(%arg0: i32) -> (i32, i32) {
    %c0_i32 = arith.constant 0 : i32
    %c0_i32_0 = arith.constant 0 : i32
    return %arg0, %c0_i32 : i32, i32
  }
  func.func @transform_10(%arg0: i32) -> (i32, i32) {
    %c0_i32 = arith.constant 0 : i32
    %c0_i32_0 = arith.constant 0 : i32
    return %arg0, %c0_i32 : i32, i32
  }
  func.func @transform_11(%arg0: i32) -> (i32, i32) {
    %c0_i32 = arith.constant 0 : i32
    %c0_i32_0 = arith.constant 0 : i32
    return %arg0, %c0_i32 : i32, i32
  }
}

</mosaic_0001>

<llo_original>
// kernel: tpu_custom_call.1
$region0: #{tpu_custom_call.1}
  #allocation0 [shape = 'u32[]', space=smem, size = 0x4, offset = 0x4, fixed_abs, tag = 'smem constant byte address 0x4 - core index']
  #allocation1 [shape = 'u32[144,128]{1,0:T(1,128)}', space=vmem, size = 0x12000, scoped, tag = 'internal scratch']
  %s0 = inlined_call_operand.hbm [shape: bf16[32,8,128], index: 0, kind: input, shape index: {}]
  %s1 = inlined_call_operand.hbm [shape: bf16[32,8,128], index: 1, kind: input, shape index: {}]
  %s2 = inlined_call_operand.hbm [shape: bf16[32,8,128], index: 2, kind: input, shape index: {}]
  %s3 = inlined_call_operand.hbm [shape: bf16[3,128,128], index: 3, kind: input, shape index: {}]
  %s4 = inlined_call_operand.vmem [shape: f32[3,1,128], index: 4, kind: input, shape index: {}]
  %s5 = inlined_call_operand.hbm [shape: bf16[3,128,128], index: 5, kind: input, shape index: {}]
  %s6 = inlined_call_operand.vmem [shape: f32[3,1,128], index: 6, kind: input, shape index: {}]
  %s7 = inlined_call_operand.hbm [shape: bf16[3,128,128], index: 7, kind: input, shape index: {}]
  %s8 = inlined_call_operand.vmem [shape: f32[3,1,128], index: 8, kind: input, shape index: {}]
  %s9 = inlined_call_operand.hbm [shape: bf16[32,128], index: 9, kind: output, shape index: {0}]
  %s10 = inlined_call_operand.hbm [shape: bf16[32,128], index: 10, kind: output, shape index: {1}]
  %s11 = inlined_call_operand.hbm [shape: bf16[32,128], index: 11, kind: output, shape index: {2}]
  %12 = xla_tuple %s9, %s10, %s11
  %s13 = sld [smem:[#allocation0]]
  $region109: #{tpu_custom_call.1} parent=0
    _
  %s15 = ssub.s32 1, %s13
  %s16 = scalar_select 0, %s15, %s13
  $region1: #{tpu_custom_call.1} parent=0
    #allocation2 [shape = 'u8[65536]{0}', space=vmem, size = 0x10000, scoped, tag = 'input window, operand 0']
    #allocation3 [shape = 's32[2]{0}', space=sflag, size = 0x8, scoped, tag = 'scoped memory for tpu_custom_call.1']
    #allocation4 [shape = 's32[2]{0}', space=sflag, size = 0x8, scoped, tag = 'scoped memory for tpu_custom_call.1']
    #allocation5 [shape = 'u8[65536]{0}', space=vmem, size = 0x10000, scoped, tag = 'input window, operand 1']
    #allocation6 [shape = 's32[2]{0}', space=sflag, size = 0x8, scoped, tag = 'scoped memory for tpu_custom_call.1']
    #allocation7 [shape = 'u8[65536]{0}', space=vmem, size = 0x10000, scoped, tag = 'input window, operand 2']
    #allocation8 [shape = 'u8[98304]{0}', space=vmem, size = 0x18000, scoped, tag = 'input window, operand 3, single buffered']
    #allocation9 [shape = 's32[1]{0}', space=sflag, size = 0x4, scoped, tag = 'scoped memory for tpu_custom_call.1']
    #allocation10 [shape = 'u8[98304]{0}', space=vmem, size = 0x18000, scoped, tag = 'input window, operand 5, single buffered']
    #allocation11 [shape = 'u8[98304]{0}', space=vmem, size = 0x18000, scoped, tag = 'input window, operand 7, single buffered']
    #allocation12 [shape = 's32[1]{0}', space=sflag, size = 0x4, scoped, tag = 'scoped memory for tpu_custom_call.1']
    #allocation13 [shape = 'u8[8192]{0}', space=vmem, size = 0x2000, scoped, tag = 'output window, operand 0']
    #allocation14 [shape = 'u8[8192]{0}', space=vmem, size = 0x2000, scoped, tag = 'output window, operand 1']
    #allocation15 [shape = 's32[2]{0}', space=sflag, size = 0x8, scoped, tag = 'scoped memory for tpu_custom_call.1']
    #allocation16 [shape = 'u8[8192]{0}', space=vmem, size = 0x2000, scoped, tag = 'output window, operand 2']
    %17 = vsyncpa [#allocation3], 0
    %s18 = scalar_lea.sflag [#allocation3], 1
    %19 = vsyncpa %s18, 0
    %20 = vsyncpa [#allocation6], 0
    %s21 = scalar_lea.sflag [#allocation6], 1
    %22 = vsyncpa %s21, 0
    %23 = vsyncpa [#allocation9], 0
    %24 = vsyncpa [#allocation12], 0
    %25 = vsyncpa [#allocation4], 0
    %s26 = scalar_lea.sflag [#allocation4], 1
    %27 = vsyncpa %s26, 0
    %28 = vsyncpa [#allocation15], 0
    %s29 = scalar_lea.sflag [#allocation15], 1
    %30 = vsyncpa %s29, 0
    loop: start=0, step=1, limit=4
    $region2: #{tpu_custom_call.1} parent=1 // loop_pre_header
      _
    $region3: #{tpu_custom_call.1} parent=1 // loop_header
      %s32 = sphi 0, %s36
      %p33 = scmp.ge.s32.totalorder %s32, 4
      %s42 = sphi 0, %s44
      %s45 = sphi 0, %s42
      %s46 = sphi 0, %s45
      %s62 = sphi 0, %s46
      %s68 = sphi 0, %s70
      %s71 = sphi 0, %s68
      %s72 = sphi 0, %s71
      %s88 = sphi 0, %s72
      %s94 = sphi 0, %s96
      %s97 = sphi 0, %s94
      %s98 = sphi 0, %s97
      %s114 = sphi 0, %s98
      %s118 = sphi 0, %s118
      %s120 = sphi 0, %s118
      %s121 = sphi 0, %s120
      %s135 = sphi 0, %s121
      %s139 = sphi 0, %s139
      %s141 = sphi 0, %s139
      %s142 = sphi 0, %s141
      %s156 = sphi 0, %s142
      %s160 = sphi 0, %s160
      %s162 = sphi 0, %s160
      %s163 = sphi 0, %s162
      %s177 = sphi 0, %s163
      %s181 = sphi 0, %s181
      %s183 = sphi 0, %s181
      %s184 = sphi 0, %s183
      %s198 = sphi 0, %s184
      %s202 = sphi 0, %s202
      %s204 = sphi 0, %s202
      %s205 = sphi 0, %s204
      %s219 = sphi 0, %s205
      %s223 = sphi 0, %s223
      %s225 = sphi 0, %s223
      %s226 = sphi 0, %s225
      %s240 = sphi 0, %s226
      %s246 = sphi 0, %s248
      %s249 = sphi 0, %s246
      %s250 = sphi 0, %s249
      %s266 = sphi 0, %s250
      %s272 = sphi 0, %s274
      %s275 = sphi 0, %s272
      %s276 = sphi 0, %s275
      %s292 = sphi 0, %s276
      %s298 = sphi 0, %s300
      %s301 = sphi 0, %s298
      %s302 = sphi 0, %s301
      %s318 = sphi 0, %s302
    $region4: #{tpu_custom_call.1} parent=1 // loop_header_branch
      %35 = sbr.rel (%p33) target = $region8
    $region5: #{tpu_custom_call.1} parent=1 // loop_body
      %s37 = ssub.s32 %s32, 1
      %s38 = ssub.s32 %s32, 2
      %s39 = sadd.s32 %s32, 1
      %s40 = ssub.s32 %s32, %s39
      %p41 = scmp.eq.s32.totalorder %s40, 0
      %s43 = sadd.s32 %s42, 1
      %s44 = scalar_select %p41, %s42, %s43
      %p47 = pneg %p41
      %p48 = scmp.eq.s32.totalorder %s32, 1
      %p49 = por %p47, %p48
      %p50 = scmp.ne.s32.totalorder %s42, %s45
      %p51 = scmp.eq.s32.totalorder %s32, 0
      %p52 = por %p50, %p51
      %p53 = scmp.ne.s32.totalorder %s42, %s45
      %p54 = scmp.eq.s32.totalorder %s37, 1
      %p55 = por %p53, %p54
      %p56 = scmp.ne.s32.totalorder %s45, %s46
      %p57 = scmp.eq.s32.totalorder %s37, 0
      %p58 = por %p56, %p57
      %p59 = scmp.ne.s32.totalorder %s45, %s46
      %p60 = scmp.eq.s32.totalorder %s38, 1
      %p61 = por %p59, %p60
      %p63 = scmp.ne.s32.totalorder %s46, %s62
      %p64 = scmp.eq.s32.totalorder %s38, 0
      %p65 = por %p63, %p64
      %s66 = ssub.s32 %s32, %s39
      %p67 = scmp.eq.s32.totalorder %s66, 0
      %s69 = sadd.s32 %s68, 1
      %s70 = scalar_select %p67, %s68, %s69
      %p73 = pneg %p67
      %p74 = scmp.eq.s32.totalorder %s32, 1
      %p75 = por %p73, %p74
      %p76 = scmp.ne.s32.totalorder %s68, %s71
      %p77 = scmp.eq.s32.totalorder %s32, 0
      %p78 = por %p76, %p77
      %p79 = scmp.ne.s32.totalorder %s68, %s71
      %p80 = scmp.eq.s32.totalorder %s37, 1
      %p81 = por %p79, %p80
      %p82 = scmp.ne.s32.totalorder %s71, %s72
      %p83 = scmp.eq.s32.totalorder %s37, 0
      %p84 = por %p82, %p83
      %p85 = scmp.ne.s32.totalorder %s71, %s72
      %p86 = scmp.eq.s32.totalorder %s38, 1
      %p87 = por %p85, %p86
      %p89 = scmp.ne.s32.totalorder %s72, %s88
      %p90 = scmp.eq.s32.totalorder %s38, 0
      %p91 = por %p89, %p90
      %s92 = ssub.s32 %s32, %s39
      %p93 = scmp.eq.s32.totalorder %s92, 0
      %s95 = sadd.s32 %s94, 1
      %s96 = scalar_select %p93, %s94, %s95
      %p99 = pneg %p93
      %p100 = scmp.eq.s32.totalorder %s32, 1
      %p101 = por %p99, %p100
      %p102 = scmp.ne.s32.totalorder %s94, %s97
      %p103 = scmp.eq.s32.totalorder %s32, 0
      %p104 = por %p102, %p103
      %p105 = scmp.ne.s32.totalorder %s94, %s97
      %p106 = scmp.eq.s32.totalorder %s37, 1
      %p107 = por %p105, %p106
      %p108 = scmp.ne.s32.totalorder %s97, %s98
      %p109 = scmp.eq.s32.totalorder %s37, 0
      %p110 = por %p108, %p109
      %p111 = scmp.ne.s32.totalorder %s97, %s98
      %p112 = scmp.eq.s32.totalorder %s38, 1
      %p113 = por %p111, %p112
      %p115 = scmp.ne.s32.totalorder %s98, %s114
      %p116 = scmp.eq.s32.totalorder %s38, 0
      %p117 = por %p115, %p116
      %s119 = sadd.s32 %s118, 1
      %p122 = scmp.eq.s32.totalorder %s32, 1
      %p123 = scmp.ne.s32.totalorder %s118, %s120
      %p124 = scmp.eq.s32.totalorder %s32, 0
      %p125 = por %p123, %p124
      %p126 = scmp.ne.s32.totalorder %s118, %s120
      %p127 = scmp.eq.s32.totalorder %s37, 1
      %p128 = por %p126, %p127
      %p129 = scmp.ne.s32.totalorder %s120, %s121
      %p130 = scmp.eq.s32.totalorder %s37, 0
      %p131 = por %p129, %p130
      %p132 = scmp.ne.s32.totalorder %s120, %s121
      %p133 = scmp.eq.s32.totalorder %s38, 1
      %p134 = por %p132, %p133
      %p136 = scmp.ne.s32.totalorder %s121, %s135
      %p137 = scmp.eq.s32.totalorder %s38, 0
      %p138 = por %p136, %p137
      %s140 = sadd.s32 %s139, 1
      %p143 = scmp.eq.s32.totalorder %s32, 1
      %p144 = scmp.ne.s32.totalorder %s139, %s141
      %p145 = scmp.eq.s32.totalorder %s32, 0
      %p146 = por %p144, %p145
      %p147 = scmp.ne.s32.totalorder %s139, %s141
      %p148 = scmp.eq.s32.totalorder %s37, 1
      %p149 = por %p147, %p148
      %p150 = scmp.ne.s32.totalorder %s141, %s142
      %p151 = scmp.eq.s32.totalorder %s37, 0
      %p152 = por %p150, %p151
      %p153 = scmp.ne.s32.totalorder %s141, %s142
      %p154 = scmp.eq.s32.totalorder %s38, 1
      %p155 = por %p153, %p154
      %p157 = scmp.ne.s32.totalorder %s142, %s156
      %p158 = scmp.eq.s32.totalorder %s38, 0
      %p159 = por %p157, %p158
      %s161 = sadd.s32 %s160, 1
      %p164 = scmp.eq.s32.totalorder %s32, 1
      %p165 = scmp.ne.s32.totalorder %s160, %s162
      %p166 = scmp.eq.s32.totalorder %s32, 0
      %p167 = por %p165, %p166
      %p168 = scmp.ne.s32.totalorder %s160, %s162
      %p169 = scmp.eq.s32.totalorder %s37, 1
      %p170 = por %p168, %p169
      %p171 = scmp.ne.s32.totalorder %s162, %s163
      %p172 = scmp.eq.s32.totalorder %s37, 0
      %p173 = por %p171, %p172
      %p174 = scmp.ne.s32.totalorder %s162, %s163
      %p175 = scmp.eq.s32.totalorder %s38, 1
      %p176 = por %p174, %p175
      %p178 = scmp.ne.s32.totalorder %s163, %s177
      %p179 = scmp.eq.s32.totalorder %s38, 0
      %p180 = por %p178, %p179
      %s182 = sadd.s32 %s181, 1
      %p185 = scmp.eq.s32.totalorder %s32, 1
      %p186 = scmp.ne.s32.totalorder %s181, %s183
      %p187 = scmp.eq.s32.totalorder %s32, 0
      %p188 = por %p186, %p187
      %p189 = scmp.ne.s32.totalorder %s181, %s183
      %p190 = scmp.eq.s32.totalorder %s37, 1
      %p191 = por %p189, %p190
      %p192 = scmp.ne.s32.totalorder %s183, %s184
      %p193 = scmp.eq.s32.totalorder %s37, 0
      %p194 = por %p192, %p193
      %p195 = scmp.ne.s32.totalorder %s183, %s184
      %p196 = scmp.eq.s32.totalorder %s38, 1
      %p197 = por %p195, %p196
      %p199 = scmp.ne.s32.totalorder %s184, %s198
      %p200 = scmp.eq.s32.totalorder %s38, 0
      %p201 = por %p199, %p200
      %s203 = sadd.s32 %s202, 1
      %p206 = scmp.eq.s32.totalorder %s32, 1
      %p207 = scmp.ne.s32.totalorder %s202, %s204
      %p208 = scmp.eq.s32.totalorder %s32, 0
      %p209 = por %p207, %p208
      %p210 = scmp.ne.s32.totalorder %s202, %s204
      %p211 = scmp.eq.s32.totalorder %s37, 1
      %p212 = por %p210, %p211
      %p213 = scmp.ne.s32.totalorder %s204, %s205
      %p214 = scmp.eq.s32.totalorder %s37, 0
      %p215 = por %p213, %p214
      %p216 = scmp.ne.s32.totalorder %s204, %s205
      %p217 = scmp.eq.s32.totalorder %s38, 1
      %p218 = por %p216, %p217
      %p220 = scmp.ne.s32.totalorder %s205, %s219
      %p221 = scmp.eq.s32.totalorder %s38, 0
      %p222 = por %p220, %p221
      %s224 = sadd.s32 %s223, 1
      %p227 = scmp.eq.s32.totalorder %s32, 1
      %p228 = scmp.ne.s32.totalorder %s223, %s225
      %p229 = scmp.eq.s32.totalorder %s32, 0
      %p230 = por %p228, %p229
      %p231 = scmp.ne.s32.totalorder %s223, %s225
      %p232 = scmp.eq.s32.totalorder %s37, 1
      %p233 = por %p231, %p232
      %p234 = scmp.ne.s32.totalorder %s225, %s226
      %p235 = scmp.eq.s32.totalorder %s37, 0
      %p236 = por %p234, %p235
      %p237 = scmp.ne.s32.totalorder %s225, %s226
      %p238 = scmp.eq.s32.totalorder %s38, 1
      %p239 = por %p237, %p238
      %p241 = scmp.ne.s32.totalorder %s226, %s240
      %p242 = scmp.eq.s32.totalorder %s38, 0
      %p243 = por %p241, %p242
      %s244 = ssub.s32 %s32, %s39
      %p245 = scmp.eq.s32.totalorder %s244, 0
      %s247 = sadd.s32 %s246, 1
      %s248 = scalar_select %p245, %s246, %s247
      %p251 = pneg %p245
      %p252 = scmp.eq.s32.totalorder %s32, 1
      %p253 = por %p251, %p252
      %p254 = scmp.ne.s32.totalorder %s246, %s249
      %p255 = scmp.eq.s32.totalorder %s32, 0
      %p256 = por %p254, %p255
      %p257 = scmp.ne.s32.totalorder %s246, %s249
      %p258 = scmp.eq.s32.totalorder %s37, 1
      %p259 = por %p257, %p258
      %p260 = scmp.ne.s32.totalorder %s249, %s250
      %p261 = scmp.eq.s32.totalorder %s37, 0
      %p262 = por %p260, %p261
      %p263 = scmp.ne.s32.totalorder %s249, %s250
      %p264 = scmp.eq.s32.totalorder %s38, 1
      %p265 = por %p263, %p264
      %p267 = scmp.ne.s32.totalorder %s250, %s266
      %p268 = scmp.eq.s32.totalorder %s38, 0
      %p269 = por %p267, %p268
      %s270 = ssub.s32 %s32, %s39
      %p271 = scmp.eq.s32.totalorder %s270, 0
      %s273 = sadd.s32 %s272, 1
      %s274 = scalar_select %p271, %s272, %s273
      %p277 = pneg %p271
      %p278 = scmp.eq.s32.totalorder %s32, 1
      %p279 = por %p277, %p278
      %p280 = scmp.ne.s32.totalorder %s272, %s275
      %p281 = scmp.eq.s32.totalorder %s32, 0
      %p282 = por %p280, %p281
      %p283 = scmp.ne.s32.totalorder %s272, %s275
      %p284 = scmp.eq.s32.totalorder %s37, 1
      %p285 = por %p283, %p284
      %p286 = scmp.ne.s32.totalorder %s275, %s276
      %p287 = scmp.eq.s32.totalorder %s37, 0
      %p288 = por %p286, %p287
      %p289 = scmp.ne.s32.totalorder %s275, %s276
      %p290 = scmp.eq.s32.totalorder %s38, 1
      %p291 = por %p289, %p290
      %p293 = scmp.ne.s32.totalorder %s276, %s292
      %p294 = scmp.eq.s32.totalorder %s38, 0
      %p295 = por %p293, %p294
      %s296 = ssub.s32 %s32, %s39
      %p297 = scmp.eq.s32.totalorder %s296, 0
      %s299 = sadd.s32 %s298, 1
      %s300 = scalar_select %p297, %s298, %s299
      %p303 = pneg %p297
      %p304 = scmp.eq.s32.totalorder %s32, 1
      %p305 = por %p303, %p304
      %p306 = scmp.ne.s32.totalorder %s298, %s301
      %p307 = scmp.eq.s32.totalorder %s32, 0
      %p308 = por %p306, %p307
      %p309 = scmp.ne.s32.totalorder %s298, %s301
      %p310 = scmp.eq.s32.totalorder %s37, 1
      %p311 = por %p309, %p310
      %p312 = scmp.ne.s32.totalorder %s301, %s302
      %p313 = scmp.eq.s32.totalorder %s37, 0
      %p314 = por %p312, %p313
      %p315 = scmp.ne.s32.totalorder %s301, %s302
      %p316 = scmp.eq.s32.totalorder %s38, 1
      %p317 = por %p315, %p316
      %p319 = scmp.ne.s32.totalorder %s302, %s318
      %p320 = scmp.eq.s32.totalorder %s38, 0
      %p321 = por %p319, %p320
      %p322 = scmp.le.s32.totalorder 1, %s32
      %p323 = scmp.lt.s32.totalorder %s32, 3
      %p324 = pnand %p322, %p323
      %p325 = pneg %p324
      // Predicated region
      $region9: #{tpu_custom_call.1} parent=5 // pred_check
        _
      $region10: #{tpu_custom_call.1} parent=5 // pred_check_branch
        %327 = sbr.rel (%p324) target = $region12
      $region11: #{tpu_custom_call.1} parent=5 // pred_region
        %s328 = ssub.s32 %s32, 1
        // Predicated region
        $region13: #{tpu_custom_call.1} parent=11 // pred_check
          %p329 = pneg %p131
        $region14: #{tpu_custom_call.1} parent=11 // pred_check_branch
          %331 = sbr.rel (%p329) target = $region16
        $region15: #{tpu_custom_call.1} parent=11 // pred_region
          %s333 = ssub.s32 3072, 3072
          %334 = vsyncadd [#allocation9], %s333
          %s335 = sshll.u32 [#allocation8], 4
          %s336 = int_to_ptr.vmem [resolvable:$true] %s335
          %341 = dma.hbm_to_vmem [thread:$0]  %s3, 3072, %s336, [#allocation9], 64, 64, 4
        $region16: #{tpu_custom_call.1} parent=11 // pred_fallthru
          _
        // Predicated region
        $region17: #{tpu_custom_call.1} parent=11 // pred_check
          %p342 = pneg %p152
        $region18: #{tpu_custom_call.1} parent=11 // pred_check_branch
          %344 = sbr.rel (%p342) target = $region20
        $region19: #{tpu_custom_call.1} parent=11 // pred_region
          _
        $region20: #{tpu_custom_call.1} parent=11 // pred_fallthru
          _
        // Predicated region
        $region21: #{tpu_custom_call.1} parent=11 // pred_check
          %p345 = pneg %p173
        $region22: #{tpu_custom_call.1} parent=11 // pred_check_branch
          %347 = sbr.rel (%p345) target = $region24
        $region23: #{tpu_custom_call.1} parent=11 // pred_region
          %s349 = ssub.s32 3072, 3072
          %350 = vsyncadd [#allocation9], %s349
          %s351 = sshll.u32 [#allocation10], 4
          %s352 = int_to_ptr.vmem [resolvable:$true] %s351
          %357 = dma.hbm_to_vmem [thread:$0]  %s5, 3072, %s352, [#allocation9], 64, 64, 4
        $region24: #{tpu_custom_call.1} parent=11 // pred_fallthru
          _
        // Predicated region
        $region25: #{tpu_custom_call.1} parent=11 // pred_check
          %p358 = pneg %p194
        $region26: #{tpu_custom_call.1} parent=11 // pred_check_branch
          %360 = sbr.rel (%p358) target = $region28
        $region27: #{tpu_custom_call.1} parent=11 // pred_region
          _
        $region28: #{tpu_custom_call.1} parent=11 // pred_fallthru
          _
        // Predicated region
        $region29: #{tpu_custom_call.1} parent=11 // pred_check
          %p361 = pneg %p215
        $region30: #{tpu_custom_call.1} parent=11 // pred_check_branch
          %363 = sbr.rel (%p361) target = $region32
        $region31: #{tpu_custom_call.1} parent=11 // pred_region
          %s365 = ssub.s32 3072, 3072
          %366 = vsyncadd [#allocation12], %s365
          %s367 = sshll.u32 [#allocation11], 4
          %s368 = int_to_ptr.vmem [resolvable:$true] %s367
          %373 = dma.hbm_to_vmem [thread:$0]  %s7, 3072, %s368, [#allocation12], 64, 64, 4
        $region32: #{tpu_custom_call.1} parent=11 // pred_fallthru
          _
        // Predicated region
        $region33: #{tpu_custom_call.1} parent=11 // pred_check
          %p374 = pneg %p236
        $region34: #{tpu_custom_call.1} parent=11 // pred_check_branch
          %376 = sbr.rel (%p374) target = $region36
        $region35: #{tpu_custom_call.1} parent=11 // pred_region
          _
        $region36: #{tpu_custom_call.1} parent=11 // pred_fallthru
          _
      $region12: #{tpu_custom_call.1} parent=5 // pred_fallthru
        _
      %p377 = scmp.lt.s32.totalorder %s32, 2
      // Predicated region
      $region37: #{tpu_custom_call.1} parent=5 // pred_check
        %p378 = pneg %p377
      $region38: #{tpu_custom_call.1} parent=5 // pred_check_branch
        %380 = sbr.rel (%p378) target = $region40
      $region39: #{tpu_custom_call.1} parent=5 // pred_region
        // Predicated region
        $region41: #{tpu_custom_call.1} parent=39 // pred_check
          %p381 = pneg %p52
        $region42: #{tpu_custom_call.1} parent=39 // pred_check_branch
          %383 = sbr.rel (%p381) target = $region44
        $region43: #{tpu_custom_call.1} parent=39 // pred_region
          %s384 = sand.u32 %s42, 1
          %s385 = scalar_lea.sflag [#allocation3], %s384
          %s386 = sand.u32 %s42, 1
          %s387 = smul.addr %s386, 64
          %s388 = scalar_lea.vmem [#allocation2], %s387
          %s389 = smul.u32 16, %s32
          %s391 = ssub.s32 1024, 1024
          %392 = vsyncadd %s385, %s391
          %s393 = smul.addr %s389, 64
          %s394 = scalar_lea.hbm %s0, %s393
          %s395 = sshll.u32 %s388, 4
          %s396 = int_to_ptr.vmem [resolvable:$true] %s395
          %401 = dma.hbm_to_vmem [thread:$0]  %s394, 1024, %s396, %s385, 64, 64, 4
        $region44: #{tpu_custom_call.1} parent=39 // pred_fallthru
          _
        // Predicated region
        $region45: #{tpu_custom_call.1} parent=39 // pred_check
          %p402 = pneg %p78
        $region46: #{tpu_custom_call.1} parent=39 // pred_check_branch
          %404 = sbr.rel (%p402) target = $region48
        $region47: #{tpu_custom_call.1} parent=39 // pred_region
          %s405 = sand.u32 %s32, 1
          %s406 = scalar_lea.sflag [#allocation6], %s405
          %s407 = sand.u32 %s68, 1
          %s408 = smul.addr %s407, 64
          %s409 = scalar_lea.vmem [#allocation5], %s408
          %s410 = smul.u32 16, %s32
          %s412 = ssub.s32 1024, 1024
          %413 = vsyncadd %s406, %s412
          %s414 = smul.addr %s410, 64
          %s415 = scalar_lea.hbm %s1, %s414
          %s416 = sshll.u32 %s409, 4
          %s417 = int_to_ptr.vmem [resolvable:$true] %s416
          %422 = dma.hbm_to_vmem [thread:$0]  %s415, 1024, %s417, %s406, 64, 64, 4
        $region48: #{tpu_custom_call.1} parent=39 // pred_fallthru
          _
        // Predicated region
        $region49: #{tpu_custom_call.1} parent=39 // pred_check
          %p423 = pneg %p104
        $region50: #{tpu_custom_call.1} parent=39 // pred_check_branch
          %425 = sbr.rel (%p423) target = $region52
        $region51: #{tpu_custom_call.1} parent=39 // pred_region
          %s426 = sand.u32 %s32, 1
          %s427 = scalar_lea.sflag [#allocation6], %s426
          %s428 = sand.u32 %s94, 1
          %s429 = smul.addr %s428, 64
          %s430 = scalar_lea.vmem [#allocation7], %s429
          %s431 = smul.u32 16, %s32
          %s433 = ssub.s32 1024, 1024
          %434 = vsyncadd %s427, %s433
          %s435 = smul.addr %s431, 64
          %s436 = scalar_lea.hbm %s2, %s435
          %s437 = sshll.u32 %s430, 4
          %s438 = int_to_ptr.vmem [resolvable:$true] %s437
          %443 = dma.hbm_to_vmem [thread:$0]  %s436, 1024, %s438, %s427, 64, 64, 4
        $region52: #{tpu_custom_call.1} parent=39 // pred_fallthru
          _
      $region40: #{tpu_custom_call.1} parent=5 // pred_fallthru
        _
      %p444 = scmp.le.s32.totalorder 1, %s32
      %p445 = scmp.lt.s32.totalorder %s32, 3
      %p446 = pnand %p444, %p445
      %p447 = pneg %p446
      // Predicated region
      $region53: #{tpu_custom_call.1} parent=5 // pred_check
        _
      $region54: #{tpu_custom_call.1} parent=5 // pred_check_branch
        %449 = sbr.rel (%p446) target = $region56
      $region55: #{tpu_custom_call.1} parent=5 // pred_region
        %s450 = ssub.s32 %s32, 1
        %s451 = sand.u32 %s45, 1
        %s452 = scalar_lea.sflag [#allocation3], %s451
        %s453 = sand.u32 %s45, 1
        %s454 = smul.addr %s453, 64
        %s455 = scalar_lea.vmem [#allocation2], %s454
        // Predicated region
        $region57: #{tpu_custom_call.1} parent=55 // pred_check
          %p456 = pneg %p58
        $region58: #{tpu_custom_call.1} parent=55 // pred_check_branch
          %458 = sbr.rel (%p456) target = $region60
        $region59: #{tpu_custom_call.1} parent=55 // pred_region
          %459 = dma.done %s452, 1024
        $region60: #{tpu_custom_call.1} parent=55 // pred_fallthru
          _
        %s460 = sand.u32 %s37, 1
        %s461 = scalar_lea.sflag [#allocation6], %s460
        %s462 = sand.u32 %s71, 1
        %s463 = smul.addr %s462, 64
        %s464 = scalar_lea.vmem [#allocation5], %s463
        // Predicated region
        $region61: #{tpu_custom_call.1} parent=55 // pred_check
          %p465 = pneg %p84
        $region62: #{tpu_custom_call.1} parent=55 // pred_check_branch
          %467 = sbr.rel (%p465) target = $region64
        $region63: #{tpu_custom_call.1} parent=55 // pred_region
          %468 = dma.done %s461, 1024
        $region64: #{tpu_custom_call.1} parent=55 // pred_fallthru
          _
        %s469 = sand.u32 %s37, 1
        %s470 = scalar_lea.sflag [#allocation6], %s469
        %s471 = sand.u32 %s97, 1
        %s472 = smul.addr %s471, 64
        %s473 = scalar_lea.vmem [#allocation7], %s472
        // Predicated region
        $region65: #{tpu_custom_call.1} parent=55 // pred_check
          %p474 = pneg %p110
        $region66: #{tpu_custom_call.1} parent=55 // pred_check_branch
          %476 = sbr.rel (%p474) target = $region68
        $region67: #{tpu_custom_call.1} parent=55 // pred_region
          %477 = dma.done %s470, 1024
        $region68: #{tpu_custom_call.1} parent=55 // pred_fallthru
          _
        // Predicated region
        $region69: #{tpu_custom_call.1} parent=55 // pred_check
          %p478 = pneg %p131
        $region70: #{tpu_custom_call.1} parent=55 // pred_check_branch
          %480 = sbr.rel (%p478) target = $region72
        $region71: #{tpu_custom_call.1} parent=55 // pred_region
          %481 = dma.done [#allocation9], 3072
        $region72: #{tpu_custom_call.1} parent=55 // pred_fallthru
          _
        // Predicated region
        $region73: #{tpu_custom_call.1} parent=55 // pred_check
          %p482 = pneg %p173
        $region74: #{tpu_custom_call.1} parent=55 // pred_check_branch
          %484 = sbr.rel (%p482) target = $region76
        $region75: #{tpu_custom_call.1} parent=55 // pred_region
          %485 = dma.done [#allocation9], 3072
        $region76: #{tpu_custom_call.1} parent=55 // pred_fallthru
          _
        // Predicated region
        $region77: #{tpu_custom_call.1} parent=55 // pred_check
          %p486 = pneg %p215
        $region78: #{tpu_custom_call.1} parent=55 // pred_check_branch
          %488 = sbr.rel (%p486) target = $region80
        $region79: #{tpu_custom_call.1} parent=55 // pred_region
          %489 = dma.done [#allocation12], 3072
        $region80: #{tpu_custom_call.1} parent=55 // pred_fallthru
          _
        %s490 = sand.u32 %s45, 1
        %s491 = scalar_lea.sflag [#allocation3], %s490
        %s492 = sand.u32 %s45, 1
        %s493 = smul.addr %s492, 64
        %s494 = scalar_lea.vmem [#allocation2], %s493
        %p495 = pneg %p58
        %p496 = pneg %p55
        %s497 = sand.u32 %s37, 1
        %s498 = scalar_lea.sflag [#allocation6], %s497
        %s499 = sand.u32 %s71, 1
        %s500 = smul.addr %s499, 64
        %s501 = scalar_lea.vmem [#allocation5], %s500
        %p502 = pneg %p84
        %p503 = pneg %p81
        %s504 = sand.u32 %s37, 1
        %s505 = scalar_lea.sflag [#allocation6], %s504
        %s506 = sand.u32 %s97, 1
        %s507 = smul.addr %s506, 64
        %s508 = scalar_lea.vmem [#allocation7], %s507
        %p509 = pneg %p110
        %p510 = pneg %p107
        %p511 = pneg %p131
        %p512 = pneg %p128
        %p513 = pneg %p152
        %p514 = pneg %p149
        %p515 = pneg %p173
        %p516 = pneg %p170
        %p517 = pneg %p194
        %p518 = pneg %p191
        %p519 = pneg %p215
        %p520 = pneg %p212
        %p521 = pneg %p236
        %p522 = pneg %p233
        %p523 = pneg %p262
        %p524 = pneg %p259
        %s525 = sand.u32 %s249, 1
        %s526 = scalar_lea.sflag [#allocation4], %s525
        %s527 = sand.u32 %s249, 1
        %s528 = smul.addr %s527, 8
        %s529 = scalar_lea.vmem [#allocation13], %s528
        %p530 = pneg %p288
        %p531 = pneg %p285
        %s532 = sand.u32 %s37, 1
        %s533 = scalar_lea.sflag [#allocation15], %s532
        %s534 = sand.u32 %s275, 1
        %s535 = smul.addr %s534, 8
        %s536 = scalar_lea.vmem [#allocation14], %s535
        %p537 = pneg %p314
        %p538 = pneg %p311
        %s539 = sand.u32 %s37, 1
        %s540 = scalar_lea.sflag [#allocation15], %s539
        %s541 = sand.u32 %s301, 1
        %s542 = smul.addr %s541, 8
        %s543 = scalar_lea.vmem [#allocation16], %s542
        %s544 = smul.u32 16, %s37
        %s545 = smul.u32 16, %s37
        %s546 = smul.u32 16, %s37
        %s547 = smul.u32 2, %s37
        %s548 = smul.u32 2, %s37
        %s549 = smul.u32 2, %s37
        %v551 = vld [vmem:[%s455] sm:$0xf]
        %v552 = vld [vmem:[%s455 + $0x4] sm:$0xf]
        %v553 = vld [vmem:[%s455 + $0x8] sm:$0xf]
        %v554 = vld [vmem:[%s455 + $0xc] sm:$0xf]
        %v555 = vld [vmem:[%s455 + $0x10] sm:$0xf]
        %v556 = vld [vmem:[%s455 + $0x14] sm:$0xf]
        %v557 = vld [vmem:[%s455 + $0x18] sm:$0xf]
        %v558 = vld [vmem:[%s455 + $0x1c] sm:$0xf]
        %v559 = vld [vmem:[%s455 + $0x20] sm:$0xf]
        %v560 = vld [vmem:[%s455 + $0x24] sm:$0xf]
        %v561 = vld [vmem:[%s455 + $0x28] sm:$0xf]
        %v562 = vld [vmem:[%s455 + $0x2c] sm:$0xf]
        %v563 = vld [vmem:[%s455 + $0x30] sm:$0xf]
        %v564 = vld [vmem:[%s455 + $0x34] sm:$0xf]
        %v565 = vld [vmem:[%s455 + $0x38] sm:$0xf]
        %v566 = vld [vmem:[%s455 + $0x3c] sm:$0xf]
        %v567 = vunpack.c.l.bf16 %v551
        %v568 = vunpack.c.l.bf16 %v552
        %v569 = vunpack.c.l.bf16 %v553
        %v570 = vunpack.c.l.bf16 %v554
        %v571 = vunpack.c.l.bf16 %v555
        %v572 = vunpack.c.l.bf16 %v556
        %v573 = vunpack.c.l.bf16 %v557
        %v574 = vunpack.c.l.bf16 %v558
        %v575 = vunpack.c.l.bf16 %v559
        %v576 = vunpack.c.l.bf16 %v560
        %v577 = vunpack.c.l.bf16 %v561
        %v578 = vunpack.c.l.bf16 %v562
        %v579 = vunpack.c.l.bf16 %v563
        %v580 = vunpack.c.l.bf16 %v564
        %v581 = vunpack.c.l.bf16 %v565
        %v582 = vunpack.c.l.bf16 %v566
        %v583 = vrot.slane %v567, 4
        %v584 = vadd.f32 %v567, %v583
        %v585 = vrot.slane %v584, 2
        %v586 = vadd.f32 %v584, %v585
        %v587 = vrot.slane %v586, 1
        %v588 = vadd.f32 %v586, %v587
        %v589 = vrot.slane %v568, 4
        %v590 = vadd.f32 %v568, %v589
        %v591 = vrot.slane %v590, 2
        %v592 = vadd.f32 %v590, %v591
        %v593 = vrot.slane %v592, 1
        %v594 = vadd.f32 %v592, %v593
        %v595 = vrot.slane %v569, 4
        %v596 = vadd.f32 %v569, %v595
        %v597 = vrot.slane %v596, 2
        %v598 = vadd.f32 %v596, %v597
        %v599 = vrot.slane %v598, 1
        %v600 = vadd.f32 %v598, %v599
        %v601 = vrot.slane %v570, 4
        %v602 = vadd.f32 %v570, %v601
        %v603 = vrot.slane %v602, 2
        %v604 = vadd.f32 %v602, %v603
        %v605 = vrot.slane %v604, 1
        %v606 = vadd.f32 %v604, %v605
        %v607 = vrot.slane %v571, 4
        %v608 = vadd.f32 %v571, %v607
        %v609 = vrot.slane %v608, 2
        %v610 = vadd.f32 %v608, %v609
        %v611 = vrot.slane %v610, 1
        %v612 = vadd.f32 %v610, %v611
        %v613 = vrot.slane %v572, 4
        %v614 = vadd.f32 %v572, %v613
        %v615 = vrot.slane %v614, 2
        %v616 = vadd.f32 %v614, %v615
        %v617 = vrot.slane %v616, 1
        %v618 = vadd.f32 %v616, %v617
        %v619 = vrot.slane %v573, 4
        %v620 = vadd.f32 %v573, %v619
        %v621 = vrot.slane %v620, 2
        %v622 = vadd.f32 %v620, %v621
        %v623 = vrot.slane %v622, 1
        %v624 = vadd.f32 %v622, %v623
        %v625 = vrot.slane %v574, 4
        %v626 = vadd.f32 %v574, %v625
        %v627 = vrot.slane %v626, 2
        %v628 = vadd.f32 %v626, %v627
        %v629 = vrot.slane %v628, 1
        %v630 = vadd.f32 %v628, %v629
        %v631 = vrot.slane %v575, 4
        %v632 = vadd.f32 %v575, %v631
        %v633 = vrot.slane %v632, 2
        %v634 = vadd.f32 %v632, %v633
        %v635 = vrot.slane %v634, 1
        %v636 = vadd.f32 %v634, %v635
        %v637 = vrot.slane %v576, 4
        %v638 = vadd.f32 %v576, %v637
        %v639 = vrot.slane %v638, 2
        %v640 = vadd.f32 %v638, %v639
        %v641 = vrot.slane %v640, 1
        %v642 = vadd.f32 %v640, %v641
        %v643 = vrot.slane %v577, 4
        %v644 = vadd.f32 %v577, %v643
        %v645 = vrot.slane %v644, 2
        %v646 = vadd.f32 %v644, %v645
        %v647 = vrot.slane %v646, 1
        %v648 = vadd.f32 %v646, %v647
        %v649 = vrot.slane %v578, 4
        %v650 = vadd.f32 %v578, %v649
        %v651 = vrot.slane %v650, 2
        %v652 = vadd.f32 %v650, %v651
        %v653 = vrot.slane %v652, 1
        %v654 = vadd.f32 %v652, %v653
        %v655 = vrot.slane %v579, 4
        %v656 = vadd.f32 %v579, %v655
        %v657 = vrot.slane %v656, 2
        %v658 = vadd.f32 %v656, %v657
        %v659 = vrot.slane %v658, 1
        %v660 = vadd.f32 %v658, %v659
        %v661 = vrot.slane %v580, 4
        %v662 = vadd.f32 %v580, %v661
        %v663 = vrot.slane %v662, 2
        %v664 = vadd.f32 %v662, %v663
        %v665 = vrot.slane %v664, 1
        %v666 = vadd.f32 %v664, %v665
        %v667 = vrot.slane %v581, 4
        %v668 = vadd.f32 %v581, %v667
        %v669 = vrot.slane %v668, 2
        %v670 = vadd.f32 %v668, %v669
        %v671 = vrot.slane %v670, 1
        %v672 = vadd.f32 %v670, %v671
        %v673 = vrot.slane %v582, 4
        %v674 = vadd.f32 %v582, %v673
        %v675 = vrot.slane %v674, 2
        %v676 = vadd.f32 %v674, %v675
        %v677 = vrot.slane %v676, 1
        %v678 = vadd.f32 %v676, %v677
        %v679 = vmul.f32 %v588, 0.125
        %v680 = vmul.f32 %v594, 0.125
        %v681 = vmul.f32 %v600, 0.125
        %v682 = vmul.f32 %v606, 0.125
        %v683 = vmul.f32 %v612, 0.125
        %v684 = vmul.f32 %v618, 0.125
        %v685 = vmul.f32 %v624, 0.125
        %v686 = vmul.f32 %v630, 0.125
        %v687 = vmul.f32 %v636, 0.125
        %v688 = vmul.f32 %v642, 0.125
        %v689 = vmul.f32 %v648, 0.125
        %v690 = vmul.f32 %v654, 0.125
        %v691 = vmul.f32 %v660, 0.125
        %v692 = vmul.f32 %v666, 0.125
        %v693 = vmul.f32 %v672, 0.125
        %v694 = vmul.f32 %v678, 0.125
        %v695 = vpack.c.bf16 %v679, %v679
        %v696 = vpack.c.bf16 %v680, %v680
        %v697 = vpack.c.bf16 %v681, %v681
        %v698 = vpack.c.bf16 %v682, %v682
        %v699 = vpack.c.bf16 %v683, %v683
        %v700 = vpack.c.bf16 %v684, %v684
        %v701 = vpack.c.bf16 %v685, %v685
        %v702 = vpack.c.bf16 %v686, %v686
        %v703 = vpack.c.bf16 %v687, %v687
        %v704 = vpack.c.bf16 %v688, %v688
        %v705 = vpack.c.bf16 %v689, %v689
        %v706 = vpack.c.bf16 %v690, %v690
        %v707 = vpack.c.bf16 %v691, %v691
        %v708 = vpack.c.bf16 %v692, %v692
        %v709 = vpack.c.bf16 %v693, %v693
        %v710 = vpack.c.bf16 %v694, %v694
        %v711 = vld [vmem:[#allocation8] sm:$0xf]
        %v712 = vld [vmem:[#allocation8 + $0x4] sm:$0xf]
        %v713 = vld [vmem:[#allocation8 + $0x8] sm:$0xf]
        %v714 = vld [vmem:[#allocation8 + $0xc] sm:$0xf]
        %v715 = vld [vmem:[#allocation8 + $0x10] sm:$0xf]
        %v716 = vld [vmem:[#allocation8 + $0x14] sm:$0xf]
        %v717 = vld [vmem:[#allocation8 + $0x18] sm:$0xf]
        %v718 = vld [vmem:[#allocation8 + $0x1c] sm:$0xf]
        %v719 = vld [vmem:[#allocation8 + $0x20] sm:$0xf]
        %v720 = vld [vmem:[#allocation8 + $0x24] sm:$0xf]
        %v721 = vld [vmem:[#allocation8 + $0x28] sm:$0xf]
        %v722 = vld [vmem:[#allocation8 + $0x2c] sm:$0xf]
        %v723 = vld [vmem:[#allocation8 + $0x30] sm:$0xf]
        %v724 = vld [vmem:[#allocation8 + $0x34] sm:$0xf]
        %v725 = vld [vmem:[#allocation8 + $0x38] sm:$0xf]
        %v726 = vld [vmem:[#allocation8 + $0x3c] sm:$0xf]
        %v727 = vld [vmem:[%s4] sm:$0x1]
        %v729 = vlaneseq
        %v730 = vshrl.u32 %v729, 7
        %v731 = vsub.s32 0, %v730
        %v732 = vrot.slane %v727, %v731
        %v750 = vunpack.c.l.b16 %v695
        %v751 = vunpack.c.l.b16 %v696
        %v752 = vunpack.c.l.b16 %v697
        %v753 = vunpack.c.l.b16 %v698
        %v754 = vunpack.c.l.b16 %v699
        %v755 = vunpack.c.l.b16 %v700
        %v756 = vunpack.c.l.b16 %v701
        %v757 = vunpack.c.l.b16 %v702
        %v758 = vunpack.c.l.b16 %v703
        %v759 = vunpack.c.l.b16 %v704
        %v760 = vunpack.c.l.b16 %v705
        %v761 = vunpack.c.l.b16 %v706
        %v762 = vunpack.c.l.b16 %v707
        %v763 = vunpack.c.l.b16 %v708
        %v764 = vunpack.c.l.b16 %v709
        %v765 = vunpack.c.l.b16 %v710
        %vm766 = vcmask 1041409
        %v767 = vsel %vm766, %v751, %v750
        %vm768 = vcmask 1042434
        %v769 = vsel %vm768, %v752, %v767
        %vm770 = vcmask 1043459
        %v771 = vsel %vm770, %v753, %v769
        %vm772 = vcmask 1044484
        %v773 = vsel %vm772, %v754, %v771
        %vm774 = vcmask 1045509
        %v775 = vsel %vm774, %v755, %v773
        %vm776 = vcmask 1046534
        %v777 = vsel %vm776, %v756, %v775
        %vm778 = vcmask 1047559
        %v779 = vsel %vm778, %v757, %v777
        %v780 = vsel %vm766, %v759, %v758
        %v781 = vsel %vm768, %v760, %v780
        %v782 = vsel %vm770, %v761, %v781
        %v783 = vsel %vm772, %v762, %v782
        %v784 = vsel %vm774, %v763, %v783
        %v785 = vsel %vm776, %v764, %v784
        %v786 = vsel %vm778, %v765, %v785
        %v787 = vpack.c.b16 %v786, %v779
        %v805 = vunpack.c.l.b16 %v711
        %v806 = vunpack.c.l.b16 %v712
        %v807 = vunpack.c.l.b16 %v713
        %v808 = vunpack.c.l.b16 %v714
        %v809 = vunpack.c.l.b16 %v715
        %v810 = vunpack.c.l.b16 %v716
        %v811 = vunpack.c.l.b16 %v717
        %v812 = vunpack.c.l.b16 %v718
        %v813 = vunpack.c.l.b16 %v719
        %v814 = vunpack.c.l.b16 %v720
        %v815 = vunpack.c.l.b16 %v721
        %v816 = vunpack.c.l.b16 %v722
        %v817 = vunpack.c.l.b16 %v723
        %v818 = vunpack.c.l.b16 %v724
        %v819 = vunpack.c.l.b16 %v725
        %v820 = vunpack.c.l.b16 %v726
        %v821 = vpack.c.b16 %v806, %v805
        %v822 = vpack.c.b16 %v808, %v807
        %v823 = vpack.c.b16 %v810, %v809
        %v824 = vpack.c.b16 %v812, %v811
        %v825 = vpack.c.b16 %v814, %v813
        %v826 = vpack.c.b16 %v816, %v815
        %v827 = vpack.c.b16 %v818, %v817
        %v828 = vpack.c.b16 %v820, %v819
        %837 = vmatprep.subr.bf16.mxu0 0
        %838 = vmatpush1.bf16.msra.mxu0 %v821
        %839 = vmatprep.subr.bf16.mxu0 0
        %840 = vmatpush1.bf16.msra.mxu0 %v822
        %841 = vmatprep.subr.bf16.mxu0 0
        %842 = vmatpush1.bf16.msra.mxu0 %v823
        %843 = vmatprep.subr.bf16.mxu0 0
        %844 = vmatpush1.bf16.msra.mxu0 %v824
        %845 = vmatprep.subr.bf16.mxu0 0
        %846 = vmatpush1.bf16.msra.mxu0 %v825
        %847 = vmatprep.subr.bf16.mxu0 0
        %848 = vmatpush1.bf16.msra.mxu0 %v826
        %849 = vmatprep.subr.bf16.mxu0 0
        %850 = vmatpush1.bf16.msra.mxu0 %v827
        %851 = vmatprep.subr.bf16.mxu0 0
        %852 = vmatpush1.bf16.msra.mxu0 %v828
        %853 = vmatprep.subr.bf16.mxu0 0
        %854 = vmatpush1.bf16.msra.mxu0 0
        %855 = vmatprep.subr.bf16.mxu0 0
        %856 = vmatpush1.bf16.msra.mxu0 0
        %857 = vmatprep.subr.bf16.mxu0 0
        %858 = vmatpush1.bf16.msra.mxu0 0
        %859 = vmatprep.subr.bf16.mxu0 0
        %860 = vmatpush1.bf16.msra.mxu0 0
        %861 = vmatprep.subr.bf16.mxu0 0
        %862 = vmatpush1.bf16.msra.mxu0 0
        %863 = vmatprep.subr.bf16.mxu0 0
        %864 = vmatpush1.bf16.msra.mxu0 0
        %865 = vmatprep.subr.bf16.mxu0 0
        %866 = vmatpush1.bf16.msra.mxu0 0
        %867 = vmatprep.subr.bf16.mxu0 0
        %868 = vmatpush1.bf16.msra.mxu0 0
        %869 = vmatprep.mubr.bf16.mxu0 0
        %870 = vmatmul.mubr.bf16.gmra.mrb[0].mxu0 %v787
        %v871 = vpop.f32.mrb[0].mxu0
        %v872 = vadd.f32 %v732, %v871
        %v873 = vpop.f32.mrb[0].mxu0
        %v874 = vpop.f32.mrb[0].mxu0
        %v875 = vadd.f32 %v732, %v874
        %v876 = vpop.f32.mrb[0].mxu0
        %877 = vdwg.mxu0
        %v878 = vmax.f32 %v872, 0.0
        %v879 = vmax.f32 %v875, 0.0
        %v880 = vpack.c.bf16 %v879, %v878
        %v881 = vld [vmem:[#allocation10] sm:$0xf]
        %v882 = vld [vmem:[#allocation10 + $0x4] sm:$0xf]
        %v883 = vld [vmem:[#allocation10 + $0x8] sm:$0xf]
        %v884 = vld [vmem:[#allocation10 + $0xc] sm:$0xf]
        %v885 = vld [vmem:[#allocation10 + $0x10] sm:$0xf]
        %v886 = vld [vmem:[#allocation10 + $0x14] sm:$0xf]
        %v887 = vld [vmem:[#allocation10 + $0x18] sm:$0xf]
        %v888 = vld [vmem:[#allocation10 + $0x1c] sm:$0xf]
        %v889 = vld [vmem:[#allocation10 + $0x20] sm:$0xf]
        %v890 = vld [vmem:[#allocation10 + $0x24] sm:$0xf]
        %v891 = vld [vmem:[#allocation10 + $0x28] sm:$0xf]
        %v892 = vld [vmem:[#allocation10 + $0x2c] sm:$0xf]
        %v893 = vld [vmem:[#allocation10 + $0x30] sm:$0xf]
        %v894 = vld [vmem:[#allocation10 + $0x34] sm:$0xf]
        %v895 = vld [vmem:[#allocation10 + $0x38] sm:$0xf]
        %v896 = vld [vmem:[#allocation10 + $0x3c] sm:$0xf]
        %v897 = vld [vmem:[%s6] sm:$0x1]
        %v899 = vlaneseq
        %v900 = vshrl.u32 %v899, 7
        %v901 = vsub.s32 0, %v900
        %v902 = vrot.slane %v897, %v901
        %v920 = vunpack.c.l.b16 %v881
        %v921 = vunpack.c.l.b16 %v882
        %v922 = vunpack.c.l.b16 %v883
        %v923 = vunpack.c.l.b16 %v884
        %v924 = vunpack.c.l.b16 %v885
        %v925 = vunpack.c.l.b16 %v886
        %v926 = vunpack.c.l.b16 %v887
        %v927 = vunpack.c.l.b16 %v888
        %v928 = vunpack.c.l.b16 %v889
        %v929 = vunpack.c.l.b16 %v890
        %v930 = vunpack.c.l.b16 %v891
        %v931 = vunpack.c.l.b16 %v892
        %v932 = vunpack.c.l.b16 %v893
        %v933 = vunpack.c.l.b16 %v894
        %v934 = vunpack.c.l.b16 %v895
        %v935 = vunpack.c.l.b16 %v896
        %v936 = vpack.c.b16 %v921, %v920
        %v937 = vpack.c.b16 %v923, %v922
        %v938 = vpack.c.b16 %v925, %v924
        %v939 = vpack.c.b16 %v927, %v926
        %v940 = vpack.c.b16 %v929, %v928
        %v941 = vpack.c.b16 %v931, %v930
        %v942 = vpack.c.b16 %v933, %v932
        %v943 = vpack.c.b16 %v935, %v934
        %952 = vmatprep.subr.bf16.mxu0 0
        %953 = vmatpush1.bf16.msra.mxu0 %v936
        %954 = vmatprep.subr.bf16.mxu0 0
        %955 = vmatpush1.bf16.msra.mxu0 %v937
        %956 = vmatprep.subr.bf16.mxu0 0
        %957 = vmatpush1.bf16.msra.mxu0 %v938
        %958 = vmatprep.subr.bf16.mxu0 0
        %959 = vmatpush1.bf16.msra.mxu0 %v939
        %960 = vmatprep.subr.bf16.mxu0 0
        %961 = vmatpush1.bf16.msra.mxu0 %v940
        %962 = vmatprep.subr.bf16.mxu0 0
        %963 = vmatpush1.bf16.msra.mxu0 %v941
        %964 = vmatprep.subr.bf16.mxu0 0
        %965 = vmatpush1.bf16.msra.mxu0 %v942
        %966 = vmatprep.subr.bf16.mxu0 0
        %967 = vmatpush1.bf16.msra.mxu0 %v943
        %968 = vmatprep.subr.bf16.mxu0 0
        %969 = vmatpush1.bf16.msra.mxu0 0
        %970 = vmatprep.subr.bf16.mxu0 0
        %971 = vmatpush1.bf16.msra.mxu0 0
        %972 = vmatprep.subr.bf16.mxu0 0
        %973 = vmatpush1.bf16.msra.mxu0 0
        %974 = vmatprep.subr.bf16.mxu0 0
        %975 = vmatpush1.bf16.msra.mxu0 0
        %976 = vmatprep.subr.bf16.mxu0 0
        %977 = vmatpush1.bf16.msra.mxu0 0
        %978 = vmatprep.subr.bf16.mxu0 0
        %979 = vmatpush1.bf16.msra.mxu0 0
        %980 = vmatprep.subr.bf16.mxu0 0
        %981 = vmatpush1.bf16.msra.mxu0 0
        %982 = vmatprep.subr.bf16.mxu0 0
        %983 = vmatpush1.bf16.msra.mxu0 0
        %984 = vmatprep.mubr.bf16.mxu0 0
        %985 = vmatmul.mubr.bf16.gmra.mrb[0].mxu0 %v880
        %v986 = vpop.f32.mrb[0].mxu0
        %v987 = vadd.f32 %v902, %v986
        %v988 = vpop.f32.mrb[0].mxu0
        %v989 = vpop.f32.mrb[0].mxu0
        %v990 = vadd.f32 %v902, %v989
        %v991 = vpop.f32.mrb[0].mxu0
        %992 = vdwg.mxu0
        %v993 = vmax.f32 %v987, 0.0
        %v994 = vmax.f32 %v990, 0.0
        %v995 = vpack.c.bf16 %v994, %v993
        %v996 = vld [vmem:[#allocation11] sm:$0xf]
        %v997 = vld [vmem:[#allocation11 + $0x4] sm:$0xf]
        %v998 = vld [vmem:[#allocation11 + $0x8] sm:$0xf]
        %v999 = vld [vmem:[#allocation11 + $0xc] sm:$0xf]
        %v1000 = vld [vmem:[#allocation11 + $0x10] sm:$0xf]
        %v1001 = vld [vmem:[#allocation11 + $0x14] sm:$0xf]
        %v1002 = vld [vmem:[#allocation11 + $0x18] sm:$0xf]
        %v1003 = vld [vmem:[#allocation11 + $0x1c] sm:$0xf]
        %v1004 = vld [vmem:[#allocation11 + $0x20] sm:$0xf]
        %v1005 = vld [vmem:[#allocation11 + $0x24] sm:$0xf]
        %v1006 = vld [vmem:[#allocation11 + $0x28] sm:$0xf]
        %v1007 = vld [vmem:[#allocation11 + $0x2c] sm:$0xf]
        %v1008 = vld [vmem:[#allocation11 + $0x30] sm:$0xf]
        %v1009 = vld [vmem:[#allocation11 + $0x34] sm:$0xf]
        %v1010 = vld [vmem:[#allocation11 + $0x38] sm:$0xf]
        %v1011 = vld [vmem:[#allocation11 + $0x3c] sm:$0xf]
        %v1012 = vld [vmem:[%s8] sm:$0x1]
        %v1014 = vlaneseq
        %v1015 = vshrl.u32 %v1014, 7
        %v1016 = vsub.s32 0, %v1015
        %v1017 = vrot.slane %v1012, %v1016
        %v1035 = vunpack.c.l.b16 %v996
        %v1036 = vunpack.c.l.b16 %v997
        %v1037 = vunpack.c.l.b16 %v998
        %v1038 = vunpack.c.l.b16 %v999
        %v1039 = vunpack.c.l.b16 %v1000
        %v1040 = vunpack.c.l.b16 %v1001
        %v1041 = vunpack.c.l.b16 %v1002
        %v1042 = vunpack.c.l.b16 %v1003
        %v1043 = vunpack.c.l.b16 %v1004
        %v1044 = vunpack.c.l.b16 %v1005
        %v1045 = vunpack.c.l.b16 %v1006
        %v1046 = vunpack.c.l.b16 %v1007
        %v1047 = vunpack.c.l.b16 %v1008
        %v1048 = vunpack.c.l.b16 %v1009
        %v1049 = vunpack.c.l.b16 %v1010
        %v1050 = vunpack.c.l.b16 %v1011
        %v1051 = vpack.c.b16 %v1036, %v1035
        %v1052 = vpack.c.b16 %v1038, %v1037
        %v1053 = vpack.c.b16 %v1040, %v1039
        %v1054 = vpack.c.b16 %v1042, %v1041
        %v1055 = vpack.c.b16 %v1044, %v1043
        %v1056 = vpack.c.b16 %v1046, %v1045
        %v1057 = vpack.c.b16 %v1048, %v1047
        %v1058 = vpack.c.b16 %v1050, %v1049
        %1067 = vmatprep.subr.bf16.mxu0 0
        %1068 = vmatpush1.bf16.msra.mxu0 %v1051
        %1069 = vmatprep.subr.bf16.mxu0 0
        %1070 = vmatpush1.bf16.msra.mxu0 %v1052
        %1071 = vmatprep.subr.bf16.mxu0 0
        %1072 = vmatpush1.bf16.msra.mxu0 %v1053
        %1073 = vmatprep.subr.bf16.mxu0 0
        %1074 = vmatpush1.bf16.msra.mxu0 %v1054
        %1075 = vmatprep.subr.bf16.mxu0 0
        %1076 = vmatpush1.bf16.msra.mxu0 %v1055
        %1077 = vmatprep.subr.bf16.mxu0 0
        %1078 = vmatpush1.bf16.msra.mxu0 %v1056
        %1079 = vmatprep.subr.bf16.mxu0 0
        %1080 = vmatpush1.bf16.msra.mxu0 %v1057
        %1081 = vmatprep.subr.bf16.mxu0 0
        %1082 = vmatpush1.bf16.msra.mxu0 %v1058
        %1083 = vmatprep.subr.bf16.mxu0 0
        %1084 = vmatpush1.bf16.msra.mxu0 0
        %1085 = vmatprep.subr.bf16.mxu0 0
        %1086 = vmatpush1.bf16.msra.mxu0 0
        %1087 = vmatprep.subr.bf16.mxu0 0
        %1088 = vmatpush1.bf16.msra.mxu0 0
        %1089 = vmatprep.subr.bf16.mxu0 0
        %1090 = vmatpush1.bf16.msra.mxu0 0
        %1091 = vmatprep.subr.bf16.mxu0 0
        %1092 = vmatpush1.bf16.msra.mxu0 0
        %1093 = vmatprep.subr.bf16.mxu0 0
        %1094 = vmatpush1.bf16.msra.mxu0 0
        %1095 = vmatprep.subr.bf16.mxu0 0
        %1096 = vmatpush1.bf16.msra.mxu0 0
        %1097 = vmatprep.subr.bf16.mxu0 0
        %1098 = vmatpush1.bf16.msra.mxu0 0
        %1099 = vmatprep.mubr.bf16.mxu0 0
        %1100 = vmatmul.mubr.bf16.gmra.mrb[0].mxu0 %v995
        %v1101 = vpop.f32.mrb[0].mxu0
        %v1102 = vadd.f32 %v1017, %v1101
        %v1103 = vpop.f32.mrb[0].mxu0
        %v1104 = vpop.f32.mrb[0].mxu0
        %v1105 = vadd.f32 %v1017, %v1104
        %v1106 = vpop.f32.mrb[0].mxu0
        %1107 = vdwg.mxu0
        %v1108 = vpack.c.bf16 %v1105, %v1102
        %v1110 = vunpack.c.l.b16 %v1108
        %v1111 = vunpack.c.h.b16 %v1108
        %v1112 = vpack.c.b16 %v1110, %v1110
        %v1113 = vpack.c.b16 %v1111, %v1111
        %1116 = vst [vmem:[%s529] sm:$0xf] %v1112
        %1117 = vst [vmem:[%s529 + $0x4] sm:$0xf] %v1113
        %v1118 = vld [vmem:[%s464] sm:$0xf]
        %v1119 = vld [vmem:[%s464 + $0x4] sm:$0xf]
        %v1120 = vld [vmem:[%s464 + $0x8] sm:$0xf]
        %v1121 = vld [vmem:[%s464 + $0xc] sm:$0xf]
        %v1122 = vld [vmem:[%s464 + $0x10] sm:$0xf]
        %v1123 = vld [vmem:[%s464 + $0x14] sm:$0xf]
        %v1124 = vld [vmem:[%s464 + $0x18] sm:$0xf]
        %v1125 = vld [vmem:[%s464 + $0x1c] sm:$0xf]
        %v1126 = vld [vmem:[%s464 + $0x20] sm:$0xf]
        %v1127 = vld [vmem:[%s464 + $0x24] sm:$0xf]
        %v1128 = vld [vmem:[%s464 + $0x28] sm:$0xf]
        %v1129 = vld [vmem:[%s464 + $0x2c] sm:$0xf]
        %v1130 = vld [vmem:[%s464 + $0x30] sm:$0xf]
        %v1131 = vld [vmem:[%s464 + $0x34] sm:$0xf]
        %v1132 = vld [vmem:[%s464 + $0x38] sm:$0xf]
        %v1133 = vld [vmem:[%s464 + $0x3c] sm:$0xf]
        %v1134 = vunpack.c.l.bf16 %v1118
        %v1135 = vunpack.c.l.bf16 %v1119
        %v1136 = vunpack.c.l.bf16 %v1120
        %v1137 = vunpack.c.l.bf16 %v1121
        %v1138 = vunpack.c.l.bf16 %v1122
        %v1139 = vunpack.c.l.bf16 %v1123
        %v1140 = vunpack.c.l.bf16 %v1124
        %v1141 = vunpack.c.l.bf16 %v1125
        %v1142 = vunpack.c.l.bf16 %v1126
        %v1143 = vunpack.c.l.bf16 %v1127
        %v1144 = vunpack.c.l.bf16 %v1128
        %v1145 = vunpack.c.l.bf16 %v1129
        %v1146 = vunpack.c.l.bf16 %v1130
        %v1147 = vunpack.c.l.bf16 %v1131
        %v1148 = vunpack.c.l.bf16 %v1132
        %v1149 = vunpack.c.l.bf16 %v1133
        %v1150 = vrot.slane %v1134, 4
        %v1151 = vadd.f32 %v1134, %v1150
        %v1152 = vrot.slane %v1151, 2
        %v1153 = vadd.f32 %v1151, %v1152
        %v1154 = vrot.slane %v1153, 1
        %v1155 = vadd.f32 %v1153, %v1154
        %v1156 = vrot.slane %v1135, 4
        %v1157 = vadd.f32 %v1135, %v1156
        %v1158 = vrot.slane %v1157, 2
        %v1159 = vadd.f32 %v1157, %v1158
        %v1160 = vrot.slane %v1159, 1
        %v1161 = vadd.f32 %v1159, %v1160
        %v1162 = vrot.slane %v1136, 4
        %v1163 = vadd.f32 %v1136, %v1162
        %v1164 = vrot.slane %v1163, 2
        %v1165 = vadd.f32 %v1163, %v1164
        %v1166 = vrot.slane %v1165, 1
        %v1167 = vadd.f32 %v1165, %v1166
        %v1168 = vrot.slane %v1137, 4
        %v1169 = vadd.f32 %v1137, %v1168
        %v1170 = vrot.slane %v1169, 2
        %v1171 = vadd.f32 %v1169, %v1170
        %v1172 = vrot.slane %v1171, 1
        %v1173 = vadd.f32 %v1171, %v1172
        %v1174 = vrot.slane %v1138, 4
        %v1175 = vadd.f32 %v1138, %v1174
        %v1176 = vrot.slane %v1175, 2
        %v1177 = vadd.f32 %v1175, %v1176
        %v1178 = vrot.slane %v1177, 1
        %v1179 = vadd.f32 %v1177, %v1178
        %v1180 = vrot.slane %v1139, 4
        %v1181 = vadd.f32 %v1139, %v1180
        %v1182 = vrot.slane %v1181, 2
        %v1183 = vadd.f32 %v1181, %v1182
        %v1184 = vrot.slane %v1183, 1
        %v1185 = vadd.f32 %v1183, %v1184
        %v1186 = vrot.slane %v1140, 4
        %v1187 = vadd.f32 %v1140, %v1186
        %v1188 = vrot.slane %v1187, 2
        %v1189 = vadd.f32 %v1187, %v1188
        %v1190 = vrot.slane %v1189, 1
        %v1191 = vadd.f32 %v1189, %v1190
        %v1192 = vrot.slane %v1141, 4
        %v1193 = vadd.f32 %v1141, %v1192
        %v1194 = vrot.slane %v1193, 2
        %v1195 = vadd.f32 %v1193, %v1194
        %v1196 = vrot.slane %v1195, 1
        %v1197 = vadd.f32 %v1195, %v1196
        %v1198 = vrot.slane %v1142, 4
        %v1199 = vadd.f32 %v1142, %v1198
        %v1200 = vrot.slane %v1199, 2
        %v1201 = vadd.f32 %v1199, %v1200
        %v1202 = vrot.slane %v1201, 1
        %v1203 = vadd.f32 %v1201, %v1202
        %v1204 = vrot.slane %v1143, 4
        %v1205 = vadd.f32 %v1143, %v1204
        %v1206 = vrot.slane %v1205, 2
        %v1207 = vadd.f32 %v1205, %v1206
        %v1208 = vrot.slane %v1207, 1
        %v1209 = vadd.f32 %v1207, %v1208
        %v1210 = vrot.slane %v1144, 4
        %v1211 = vadd.f32 %v1144, %v1210
        %v1212 = vrot.slane %v1211, 2
        %v1213 = vadd.f32 %v1211, %v1212
        %v1214 = vrot.slane %v1213, 1
        %v1215 = vadd.f32 %v1213, %v1214
        %v1216 = vrot.slane %v1145, 4
        %v1217 = vadd.f32 %v1145, %v1216
        %v1218 = vrot.slane %v1217, 2
        %v1219 = vadd.f32 %v1217, %v1218
        %v1220 = vrot.slane %v1219, 1
        %v1221 = vadd.f32 %v1219, %v1220
        %v1222 = vrot.slane %v1146, 4
        %v1223 = vadd.f32 %v1146, %v1222
        %v1224 = vrot.slane %v1223, 2
        %v1225 = vadd.f32 %v1223, %v1224
        %v1226 = vrot.slane %v1225, 1
        %v1227 = vadd.f32 %v1225, %v1226
        %v1228 = vrot.slane %v1147, 4
        %v1229 = vadd.f32 %v1147, %v1228
        %v1230 = vrot.slane %v1229, 2
        %v1231 = vadd.f32 %v1229, %v1230
        %v1232 = vrot.slane %v1231, 1
        %v1233 = vadd.f32 %v1231, %v1232
        %v1234 = vrot.slane %v1148, 4
        %v1235 = vadd.f32 %v1148, %v1234
        %v1236 = vrot.slane %v1235, 2
        %v1237 = vadd.f32 %v1235, %v1236
        %v1238 = vrot.slane %v1237, 1
        %v1239 = vadd.f32 %v1237, %v1238
        %v1240 = vrot.slane %v1149, 4
        %v1241 = vadd.f32 %v1149, %v1240
        %v1242 = vrot.slane %v1241, 2
        %v1243 = vadd.f32 %v1241, %v1242
        %v1244 = vrot.slane %v1243, 1
        %v1245 = vadd.f32 %v1243, %v1244
        %v1246 = vmul.f32 %v1155, 0.125
        %v1247 = vmul.f32 %v1161, 0.125
        %v1248 = vmul.f32 %v1167, 0.125
        %v1249 = vmul.f32 %v1173, 0.125
        %v1250 = vmul.f32 %v1179, 0.125
        %v1251 = vmul.f32 %v1185, 0.125
        %v1252 = vmul.f32 %v1191, 0.125
        %v1253 = vmul.f32 %v1197, 0.125
        %v1254 = vmul.f32 %v1203, 0.125
        %v1255 = vmul.f32 %v1209, 0.125
        %v1256 = vmul.f32 %v1215, 0.125
        %v1257 = vmul.f32 %v1221, 0.125
        %v1258 = vmul.f32 %v1227, 0.125
        %v1259 = vmul.f32 %v1233, 0.125
        %v1260 = vmul.f32 %v1239, 0.125
        %v1261 = vmul.f32 %v1245, 0.125
        %v1262 = vpack.c.bf16 %v1246, %v1246
        %v1263 = vpack.c.bf16 %v1247, %v1247
        %v1264 = vpack.c.bf16 %v1248, %v1248
        %v1265 = vpack.c.bf16 %v1249, %v1249
        %v1266 = vpack.c.bf16 %v1250, %v1250
        %v1267 = vpack.c.bf16 %v1251, %v1251
        %v1268 = vpack.c.bf16 %v1252, %v1252
        %v1269 = vpack.c.bf16 %v1253, %v1253
        %v1270 = vpack.c.bf16 %v1254, %v1254
        %v1271 = vpack.c.bf16 %v1255, %v1255
        %v1272 = vpack.c.bf16 %v1256, %v1256
        %v1273 = vpack.c.bf16 %v1257, %v1257
        %v1274 = vpack.c.bf16 %v1258, %v1258
        %v1275 = vpack.c.bf16 %v1259, %v1259
        %v1276 = vpack.c.bf16 %v1260, %v1260
        %v1277 = vpack.c.bf16 %v1261, %v1261
        %s1278 = scalar_lea.vmem [#allocation8], 64
        %v1279 = vld [vmem:[%s1278] sm:$0xf]
        %v1280 = vld [vmem:[%s1278 + $0x4] sm:$0xf]
        %v1281 = vld [vmem:[%s1278 + $0x8] sm:$0xf]
        %v1282 = vld [vmem:[%s1278 + $0xc] sm:$0xf]
        %v1283 = vld [vmem:[%s1278 + $0x10] sm:$0xf]
        %v1284 = vld [vmem:[%s1278 + $0x14] sm:$0xf]
        %v1285 = vld [vmem:[%s1278 + $0x18] sm:$0xf]
        %v1286 = vld [vmem:[%s1278 + $0x1c] sm:$0xf]
        %v1287 = vld [vmem:[%s1278 + $0x20] sm:$0xf]
        %v1288 = vld [vmem:[%s1278 + $0x24] sm:$0xf]
        %v1289 = vld [vmem:[%s1278 + $0x28] sm:$0xf]
        %v1290 = vld [vmem:[%s1278 + $0x2c] sm:$0xf]
        %v1291 = vld [vmem:[%s1278 + $0x30] sm:$0xf]
        %v1292 = vld [vmem:[%s1278 + $0x34] sm:$0xf]
        %v1293 = vld [vmem:[%s1278 + $0x38] sm:$0xf]
        %v1294 = vld [vmem:[%s1278 + $0x3c] sm:$0xf]
        %s1295 = scalar_lea.vmem %s4, 1
        %v1296 = vld [vmem:[%s1295] sm:$0x1]
        %v1298 = vlaneseq
        %v1299 = vshrl.u32 %v1298, 7
        %v1300 = vsub.s32 0, %v1299
        %v1301 = vrot.slane %v1296, %v1300
        %v1319 = vunpack.c.l.b16 %v1262
        %v1320 = vunpack.c.l.b16 %v1263
        %v1321 = vunpack.c.l.b16 %v1264
        %v1322 = vunpack.c.l.b16 %v1265
        %v1323 = vunpack.c.l.b16 %v1266
        %v1324 = vunpack.c.l.b16 %v1267
        %v1325 = vunpack.c.l.b16 %v1268
        %v1326 = vunpack.c.l.b16 %v1269
        %v1327 = vunpack.c.l.b16 %v1270
        %v1328 = vunpack.c.l.b16 %v1271
        %v1329 = vunpack.c.l.b16 %v1272
        %v1330 = vunpack.c.l.b16 %v1273
        %v1331 = vunpack.c.l.b16 %v1274
        %v1332 = vunpack.c.l.b16 %v1275
        %v1333 = vunpack.c.l.b16 %v1276
        %v1334 = vunpack.c.l.b16 %v1277
        %v1335 = vsel %vm766, %v1320, %v1319
        %v1336 = vsel %vm768, %v1321, %v1335
        %v1337 = vsel %vm770, %v1322, %v1336
        %v1338 = vsel %vm772, %v1323, %v1337
        %v1339 = vsel %vm774, %v1324, %v1338
        %v1340 = vsel %vm776, %v1325, %v1339
        %v1341 = vsel %vm778, %v1326, %v1340
        %v1342 = vsel %vm766, %v1328, %v1327
        %v1343 = vsel %vm768, %v1329, %v1342
        %v1344 = vsel %vm770, %v1330, %v1343
        %v1345 = vsel %vm772, %v1331, %v1344
        %v1346 = vsel %vm774, %v1332, %v1345
        %v1347 = vsel %vm776, %v1333, %v1346
        %v1348 = vsel %vm778, %v1334, %v1347
        %v1349 = vpack.c.b16 %v1348, %v1341
        %v1367 = vunpack.c.l.b16 %v1279
        %v1368 = vunpack.c.l.b16 %v1280
        %v1369 = vunpack.c.l.b16 %v1281
        %v1370 = vunpack.c.l.b16 %v1282
        %v1371 = vunpack.c.l.b16 %v1283
        %v1372 = vunpack.c.l.b16 %v1284
        %v1373 = vunpack.c.l.b16 %v1285
        %v1374 = vunpack.c.l.b16 %v1286
        %v1375 = vunpack.c.l.b16 %v1287
        %v1376 = vunpack.c.l.b16 %v1288
        %v1377 = vunpack.c.l.b16 %v1289
        %v1378 = vunpack.c.l.b16 %v1290
        %v1379 = vunpack.c.l.b16 %v1291
        %v1380 = vunpack.c.l.b16 %v1292
        %v1381 = vunpack.c.l.b16 %v1293
        %v1382 = vunpack.c.l.b16 %v1294
        %v1383 = vpack.c.b16 %v1368, %v1367
        %v1384 = vpack.c.b16 %v1370, %v1369
        %v1385 = vpack.c.b16 %v1372, %v1371
        %v1386 = vpack.c.b16 %v1374, %v1373
        %v1387 = vpack.c.b16 %v1376, %v1375
        %v1388 = vpack.c.b16 %v1378, %v1377
        %v1389 = vpack.c.b16 %v1380, %v1379
        %v1390 = vpack.c.b16 %v1382, %v1381
        %1399 = vmatprep.subr.bf16.mxu0 0
        %1400 = vmatpush1.bf16.msra.mxu0 %v1383
        %1401 = vmatprep.subr.bf16.mxu0 0
        %1402 = vmatpush1.bf16.msra.mxu0 %v1384
        %1403 = vmatprep.subr.bf16.mxu0 0
        %1404 = vmatpush1.bf16.msra.mxu0 %v1385
        %1405 = vmatprep.subr.bf16.mxu0 0
        %1406 = vmatpush1.bf16.msra.mxu0 %v1386
        %1407 = vmatprep.subr.bf16.mxu0 0
        %1408 = vmatpush1.bf16.msra.mxu0 %v1387
        %1409 = vmatprep.subr.bf16.mxu0 0
        %1410 = vmatpush1.bf16.msra.mxu0 %v1388
        %1411 = vmatprep.subr.bf16.mxu0 0
        %1412 = vmatpush1.bf16.msra.mxu0 %v1389
        %1413 = vmatprep.subr.bf16.mxu0 0
        %1414 = vmatpush1.bf16.msra.mxu0 %v1390
        %1415 = vmatprep.subr.bf16.mxu0 0
        %1416 = vmatpush1.bf16.msra.mxu0 0
        %1417 = vmatprep.subr.bf16.mxu0 0
        %1418 = vmatpush1.bf16.msra.mxu0 0
        %1419 = vmatprep.subr.bf16.mxu0 0
        %1420 = vmatpush1.bf16.msra.mxu0 0
        %1421 = vmatprep.subr.bf16.mxu0 0
        %1422 = vmatpush1.bf16.msra.mxu0 0
        %1423 = vmatprep.subr.bf16.mxu0 0
        %1424 = vmatpush1.bf16.msra.mxu0 0
        %1425 = vmatprep.subr.bf16.mxu0 0
        %1426 = vmatpush1.bf16.msra.mxu0 0
        %1427 = vmatprep.subr.bf16.mxu0 0
        %1428 = vmatpush1.bf16.msra.mxu0 0
        %1429 = vmatprep.subr.bf16.mxu0 0
        %1430 = vmatpush1.bf16.msra.mxu0 0
        %1431 = vmatprep.mubr.bf16.mxu0 0
        %1432 = vmatmul.mubr.bf16.gmra.mrb[0].mxu0 %v1349
        %v1433 = vpop.f32.mrb[0].mxu0
        %v1434 = vadd.f32 %v1301, %v1433
        %v1435 = vpop.f32.mrb[0].mxu0
        %v1436 = vpop.f32.mrb[0].mxu0
        %v1437 = vadd.f32 %v1301, %v1436
        %v1438 = vpop.f32.mrb[0].mxu0
        %1439 = vdwg.mxu0
        %v1440 = vmax.f32 %v1434, 0.0
        %v1441 = vmax.f32 %v1437, 0.0
        %v1442 = vpack.c.bf16 %v1441, %v1440
        %s1443 = scalar_lea.vmem [#allocation10], 64
        %v1444 = vld [vmem:[%s1443] sm:$0xf]
        %v1445 = vld [vmem:[%s1443 + $0x4] sm:$0xf]
        %v1446 = vld [vmem:[%s1443 + $0x8] sm:$0xf]
        %v1447 = vld [vmem:[%s1443 + $0xc] sm:$0xf]
        %v1448 = vld [vmem:[%s1443 + $0x10] sm:$0xf]
        %v1449 = vld [vmem:[%s1443 + $0x14] sm:$0xf]
        %v1450 = vld [vmem:[%s1443 + $0x18] sm:$0xf]
        %v1451 = vld [vmem:[%s1443 + $0x1c] sm:$0xf]
        %v1452 = vld [vmem:[%s1443 + $0x20] sm:$0xf]
        %v1453 = vld [vmem:[%s1443 + $0x24] sm:$0xf]
        %v1454 = vld [vmem:[%s1443 + $0x28] sm:$0xf]
        %v1455 = vld [vmem:[%s1443 + $0x2c] sm:$0xf]
        %v1456 = vld [vmem:[%s1443 + $0x30] sm:$0xf]
        %v1457 = vld [vmem:[%s1443 + $0x34] sm:$0xf]
        %v1458 = vld [vmem:[%s1443 + $0x38] sm:$0xf]
        %v1459 = vld [vmem:[%s1443 + $0x3c] sm:$0xf]
        %s1460 = scalar_lea.vmem %s6, 1
        %v1461 = vld [vmem:[%s1460] sm:$0x1]
        %v1463 = vlaneseq
        %v1464 = vshrl.u32 %v1463, 7
        %v1465 = vsub.s32 0, %v1464
        %v1466 = vrot.slane %v1461, %v1465
        %v1484 = vunpack.c.l.b16 %v1444
        %v1485 = vunpack.c.l.b16 %v1445
        %v1486 = vunpack.c.l.b16 %v1446
        %v1487 = vunpack.c.l.b16 %v1447
        %v1488 = vunpack.c.l.b16 %v1448
        %v1489 = vunpack.c.l.b16 %v1449
        %v1490 = vunpack.c.l.b16 %v1450
        %v1491 = vunpack.c.l.b16 %v1451
        %v1492 = vunpack.c.l.b16 %v1452
        %v1493 = vunpack.c.l.b16 %v1453
        %v1494 = vunpack.c.l.b16 %v1454
        %v1495 = vunpack.c.l.b16 %v1455
        %v1496 = vunpack.c.l.b16 %v1456
        %v1497 = vunpack.c.l.b16 %v1457
        %v1498 = vunpack.c.l.b16 %v1458
        %v1499 = vunpack.c.l.b16 %v1459
        %v1500 = vpack.c.b16 %v1485, %v1484
        %v1501 = vpack.c.b16 %v1487, %v1486
        %v1502 = vpack.c.b16 %v1489, %v1488
        %v1503 = vpack.c.b16 %v1491, %v1490
        %v1504 = vpack.c.b16 %v1493, %v1492
        %v1505 = vpack.c.b16 %v1495, %v1494
        %v1506 = vpack.c.b16 %v1497, %v1496
        %v1507 = vpack.c.b16 %v1499, %v1498
        %1516 = vmatprep.subr.bf16.mxu0 0
        %1517 = vmatpush1.bf16.msra.mxu0 %v1500
        %1518 = vmatprep.subr.bf16.mxu0 0
        %1519 = vmatpush1.bf16.msra.mxu0 %v1501
        %1520 = vmatprep.subr.bf16.mxu0 0
        %1521 = vmatpush1.bf16.msra.mxu0 %v1502
        %1522 = vmatprep.subr.bf16.mxu0 0
        %1523 = vmatpush1.bf16.msra.mxu0 %v1503
        %1524 = vmatprep.subr.bf16.mxu0 0
        %1525 = vmatpush1.bf16.msra.mxu0 %v1504
        %1526 = vmatprep.subr.bf16.mxu0 0
        %1527 = vmatpush1.bf16.msra.mxu0 %v1505
        %1528 = vmatprep.subr.bf16.mxu0 0
        %1529 = vmatpush1.bf16.msra.mxu0 %v1506
        %1530 = vmatprep.subr.bf16.mxu0 0
        %1531 = vmatpush1.bf16.msra.mxu0 %v1507
        %1532 = vmatprep.subr.bf16.mxu0 0
        %1533 = vmatpush1.bf16.msra.mxu0 0
        %1534 = vmatprep.subr.bf16.mxu0 0
        %1535 = vmatpush1.bf16.msra.mxu0 0
        %1536 = vmatprep.subr.bf16.mxu0 0
        %1537 = vmatpush1.bf16.msra.mxu0 0
        %1538 = vmatprep.subr.bf16.mxu0 0
        %1539 = vmatpush1.bf16.msra.mxu0 0
        %1540 = vmatprep.subr.bf16.mxu0 0
        %1541 = vmatpush1.bf16.msra.mxu0 0
        %1542 = vmatprep.subr.bf16.mxu0 0
        %1543 = vmatpush1.bf16.msra.mxu0 0
        %1544 = vmatprep.subr.bf16.mxu0 0
        %1545 = vmatpush1.bf16.msra.mxu0 0
        %1546 = vmatprep.subr.bf16.mxu0 0
        %1547 = vmatpush1.bf16.msra.mxu0 0
        %1548 = vmatprep.mubr.bf16.mxu0 0
        %1549 = vmatmul.mubr.bf16.gmra.mrb[0].mxu0 %v1442
        %v1550 = vpop.f32.mrb[0].mxu0
        %v1551 = vadd.f32 %v1466, %v1550
        %v1552 = vpop.f32.mrb[0].mxu0
        %v1553 = vpop.f32.mrb[0].mxu0
        %v1554 = vadd.f32 %v1466, %v1553
        %v1555 = vpop.f32.mrb[0].mxu0
        %1556 = vdwg.mxu0
        %v1557 = vmax.f32 %v1551, 0.0
        %v1558 = vmax.f32 %v1554, 0.0
        %v1559 = vpack.c.bf16 %v1558, %v1557
        %s1560 = scalar_lea.vmem [#allocation11], 64
        %v1561 = vld [vmem:[%s1560] sm:$0xf]
        %v1562 = vld [vmem:[%s1560 + $0x4] sm:$0xf]
        %v1563 = vld [vmem:[%s1560 + $0x8] sm:$0xf]
        %v1564 = vld [vmem:[%s1560 + $0xc] sm:$0xf]
        %v1565 = vld [vmem:[%s1560 + $0x10] sm:$0xf]
        %v1566 = vld [vmem:[%s1560 + $0x14] sm:$0xf]
        %v1567 = vld [vmem:[%s1560 + $0x18] sm:$0xf]
        %v1568 = vld [vmem:[%s1560 + $0x1c] sm:$0xf]
        %v1569 = vld [vmem:[%s1560 + $0x20] sm:$0xf]
        %v1570 = vld [vmem:[%s1560 + $0x24] sm:$0xf]
        %v1571 = vld [vmem:[%s1560 + $0x28] sm:$0xf]
        %v1572 = vld [vmem:[%s1560 + $0x2c] sm:$0xf]
        %v1573 = vld [vmem:[%s1560 + $0x30] sm:$0xf]
        %v1574 = vld [vmem:[%s1560 + $0x34] sm:$0xf]
        %v1575 = vld [vmem:[%s1560 + $0x38] sm:$0xf]
        %v1576 = vld [vmem:[%s1560 + $0x3c] sm:$0xf]
        %s1577 = scalar_lea.vmem %s8, 1
        %v1578 = vld [vmem:[%s1577] sm:$0x1]
        %v1580 = vlaneseq
        %v1581 = vshrl.u32 %v1580, 7
        %v1582 = vsub.s32 0, %v1581
        %v1583 = vrot.slane %v1578, %v1582
        %v1601 = vunpack.c.l.b16 %v1561
        %v1602 = vunpack.c.l.b16 %v1562
        %v1603 = vunpack.c.l.b16 %v1563
        %v1604 = vunpack.c.l.b16 %v1564
        %v1605 = vunpack.c.l.b16 %v1565
        %v1606 = vunpack.c.l.b16 %v1566
        %v1607 = vunpack.c.l.b16 %v1567
        %v1608 = vunpack.c.l.b16 %v1568
        %v1609 = vunpack.c.l.b16 %v1569
        %v1610 = vunpack.c.l.b16 %v1570
        %v1611 = vunpack.c.l.b16 %v1571
        %v1612 = vunpack.c.l.b16 %v1572
        %v1613 = vunpack.c.l.b16 %v1573
        %v1614 = vunpack.c.l.b16 %v1574
        %v1615 = vunpack.c.l.b16 %v1575
        %v1616 = vunpack.c.l.b16 %v1576
        %v1617 = vpack.c.b16 %v1602, %v1601
        %v1618 = vpack.c.b16 %v1604, %v1603
        %v1619 = vpack.c.b16 %v1606, %v1605
        %v1620 = vpack.c.b16 %v1608, %v1607
        %v1621 = vpack.c.b16 %v1610, %v1609
        %v1622 = vpack.c.b16 %v1612, %v1611
        %v1623 = vpack.c.b16 %v1614, %v1613
        %v1624 = vpack.c.b16 %v1616, %v1615
        %1633 = vmatprep.subr.bf16.mxu0 0
        %1634 = vmatpush1.bf16.msra.mxu0 %v1617
        %1635 = vmatprep.subr.bf16.mxu0 0
        %1636 = vmatpush1.bf16.msra.mxu0 %v1618
        %1637 = vmatprep.subr.bf16.mxu0 0
        %1638 = vmatpush1.bf16.msra.mxu0 %v1619
        %1639 = vmatprep.subr.bf16.mxu0 0
        %1640 = vmatpush1.bf16.msra.mxu0 %v1620
        %1641 = vmatprep.subr.bf16.mxu0 0
        %1642 = vmatpush1.bf16.msra.mxu0 %v1621
        %1643 = vmatprep.subr.bf16.mxu0 0
        %1644 = vmatpush1.bf16.msra.mxu0 %v1622
        %1645 = vmatprep.subr.bf16.mxu0 0
        %1646 = vmatpush1.bf16.msra.mxu0 %v1623
        %1647 = vmatprep.subr.bf16.mxu0 0
        %1648 = vmatpush1.bf16.msra.mxu0 %v1624
        %1649 = vmatprep.subr.bf16.mxu0 0
        %1650 = vmatpush1.bf16.msra.mxu0 0
        %1651 = vmatprep.subr.bf16.mxu0 0
        %1652 = vmatpush1.bf16.msra.mxu0 0
        %1653 = vmatprep.subr.bf16.mxu0 0
        %1654 = vmatpush1.bf16.msra.mxu0 0
        %1655 = vmatprep.subr.bf16.mxu0 0
        %1656 = vmatpush1.bf16.msra.mxu0 0
        %1657 = vmatprep.subr.bf16.mxu0 0
        %1658 = vmatpush1.bf16.msra.mxu0 0
        %1659 = vmatprep.subr.bf16.mxu0 0
        %1660 = vmatpush1.bf16.msra.mxu0 0
        %1661 = vmatprep.subr.bf16.mxu0 0
        %1662 = vmatpush1.bf16.msra.mxu0 0
        %1663 = vmatprep.subr.bf16.mxu0 0
        %1664 = vmatpush1.bf16.msra.mxu0 0
        %1665 = vmatprep.mubr.bf16.mxu0 0
        %1666 = vmatmul.mubr.bf16.gmra.mrb[0].mxu0 %v1559
        %v1667 = vpop.f32.mrb[0].mxu0
        %v1668 = vadd.f32 %v1583, %v1667
        %v1669 = vpop.f32.mrb[0].mxu0
        %v1670 = vpop.f32.mrb[0].mxu0
        %v1671 = vadd.f32 %v1583, %v1670
        %v1672 = vpop.f32.mrb[0].mxu0
        %1673 = vdwg.mxu0
        %v1674 = vpack.c.bf16 %v1671, %v1668
        %v1676 = vunpack.c.l.b16 %v1674
        %v1677 = vunpack.c.h.b16 %v1674
        %v1678 = vpack.c.b16 %v1676, %v1676
        %v1679 = vpack.c.b16 %v1677, %v1677
        %1682 = vst [vmem:[%s536] sm:$0xf] %v1678
        %1683 = vst [vmem:[%s536 + $0x4] sm:$0xf] %v1679
        %v1684 = vld [vmem:[%s473] sm:$0xf]
        %v1685 = vld [vmem:[%s473 + $0x4] sm:$0xf]
        %v1686 = vld [vmem:[%s473 + $0x8] sm:$0xf]
        %v1687 = vld [vmem:[%s473 + $0xc] sm:$0xf]
        %v1688 = vld [vmem:[%s473 + $0x10] sm:$0xf]
        %v1689 = vld [vmem:[%s473 + $0x14] sm:$0xf]
        %v1690 = vld [vmem:[%s473 + $0x18] sm:$0xf]
        %v1691 = vld [vmem:[%s473 + $0x1c] sm:$0xf]
        %v1692 = vld [vmem:[%s473 + $0x20] sm:$0xf]
        %v1693 = vld [vmem:[%s473 + $0x24] sm:$0xf]
        %v1694 = vld [vmem:[%s473 + $0x28] sm:$0xf]
        %v1695 = vld [vmem:[%s473 + $0x2c] sm:$0xf]
        %v1696 = vld [vmem:[%s473 + $0x30] sm:$0xf]
        %v1697 = vld [vmem:[%s473 + $0x34] sm:$0xf]
        %v1698 = vld [vmem:[%s473 + $0x38] sm:$0xf]
        %v1699 = vld [vmem:[%s473 + $0x3c] sm:$0xf]
        %v1700 = vunpack.c.l.bf16 %v1684
        %v1701 = vunpack.c.l.bf16 %v1685
        %v1702 = vunpack.c.l.bf16 %v1686
        %v1703 = vunpack.c.l.bf16 %v1687
        %v1704 = vunpack.c.l.bf16 %v1688
        %v1705 = vunpack.c.l.bf16 %v1689
        %v1706 = vunpack.c.l.bf16 %v1690
        %v1707 = vunpack.c.l.bf16 %v1691
        %v1708 = vunpack.c.l.bf16 %v1692
        %v1709 = vunpack.c.l.bf16 %v1693
        %v1710 = vunpack.c.l.bf16 %v1694
        %v1711 = vunpack.c.l.bf16 %v1695
        %v1712 = vunpack.c.l.bf16 %v1696
        %v1713 = vunpack.c.l.bf16 %v1697
        %v1714 = vunpack.c.l.bf16 %v1698
        %v1715 = vunpack.c.l.bf16 %v1699
        %v1716 = vrot.slane %v1700, 4
        %v1717 = vadd.f32 %v1700, %v1716
        %v1718 = vrot.slane %v1717, 2
        %v1719 = vadd.f32 %v1717, %v1718
        %v1720 = vrot.slane %v1719, 1
        %v1721 = vadd.f32 %v1719, %v1720
        %v1722 = vrot.slane %v1701, 4
        %v1723 = vadd.f32 %v1701, %v1722
        %v1724 = vrot.slane %v1723, 2
        %v1725 = vadd.f32 %v1723, %v1724
        %v1726 = vrot.slane %v1725, 1
        %v1727 = vadd.f32 %v1725, %v1726
        %v1728 = vrot.slane %v1702, 4
        %v1729 = vadd.f32 %v1702, %v1728
        %v1730 = vrot.slane %v1729, 2
        %v1731 = vadd.f32 %v1729, %v1730
        %v1732 = vrot.slane %v1731, 1
        %v1733 = vadd.f32 %v1731, %v1732
        %v1734 = vrot.slane %v1703, 4
        %v1735 = vadd.f32 %v1703, %v1734
        %v1736 = vrot.slane %v1735, 2
        %v1737 = vadd.f32 %v1735, %v1736
        %v1738 = vrot.slane %v1737, 1
        %v1739 = vadd.f32 %v1737, %v1738
        %v1740 = vrot.slane %v1704, 4
        %v1741 = vadd.f32 %v1704, %v1740
        %v1742 = vrot.slane %v1741, 2
        %v1743 = vadd.f32 %v1741, %v1742
        %v1744 = vrot.slane %v1743, 1
        %v1745 = vadd.f32 %v1743, %v1744
        %v1746 = vrot.slane %v1705, 4
        %v1747 = vadd.f32 %v1705, %v1746
        %v1748 = vrot.slane %v1747, 2
        %v1749 = vadd.f32 %v1747, %v1748
        %v1750 = vrot.slane %v1749, 1
        %v1751 = vadd.f32 %v1749, %v1750
        %v1752 = vrot.slane %v1706, 4
        %v1753 = vadd.f32 %v1706, %v1752
        %v1754 = vrot.slane %v1753, 2
        %v1755 = vadd.f32 %v1753, %v1754
        %v1756 = vrot.slane %v1755, 1
        %v1757 = vadd.f32 %v1755, %v1756
        %v1758 = vrot.slane %v1707, 4
        %v1759 = vadd.f32 %v1707, %v1758
        %v1760 = vrot.slane %v1759, 2
        %v1761 = vadd.f32 %v1759, %v1760
        %v1762 = vrot.slane %v1761, 1
        %v1763 = vadd.f32 %v1761, %v1762
        %v1764 = vrot.slane %v1708, 4
        %v1765 = vadd.f32 %v1708, %v1764
        %v1766 = vrot.slane %v1765, 2
        %v1767 = vadd.f32 %v1765, %v1766
        %v1768 = vrot.slane %v1767, 1
        %v1769 = vadd.f32 %v1767, %v1768
        %v1770 = vrot.slane %v1709, 4
        %v1771 = vadd.f32 %v1709, %v1770
        %v1772 = vrot.slane %v1771, 2
        %v1773 = vadd.f32 %v1771, %v1772
        %v1774 = vrot.slane %v1773, 1
        %v1775 = vadd.f32 %v1773, %v1774
        %v1776 = vrot.slane %v1710, 4
        %v1777 = vadd.f32 %v1710, %v1776
        %v1778 = vrot.slane %v1777, 2
        %v1779 = vadd.f32 %v1777, %v1778
        %v1780 = vrot.slane %v1779, 1
        %v1781 = vadd.f32 %v1779, %v1780
        %v1782 = vrot.slane %v1711, 4
        %v1783 = vadd.f32 %v1711, %v1782
        %v1784 = vrot.slane %v1783, 2
        %v1785 = vadd.f32 %v1783, %v1784
        %v1786 = vrot.slane %v1785, 1
        %v1787 = vadd.f32 %v1785, %v1786
        %v1788 = vrot.slane %v1712, 4
        %v1789 = vadd.f32 %v1712, %v1788
        %v1790 = vrot.slane %v1789, 2
        %v1791 = vadd.f32 %v1789, %v1790
        %v1792 = vrot.slane %v1791, 1
        %v1793 = vadd.f32 %v1791, %v1792
        %v1794 = vrot.slane %v1713, 4
        %v1795 = vadd.f32 %v1713, %v1794
        %v1796 = vrot.slane %v1795, 2
        %v1797 = vadd.f32 %v1795, %v1796
        %v1798 = vrot.slane %v1797, 1
        %v1799 = vadd.f32 %v1797, %v1798
        %v1800 = vrot.slane %v1714, 4
        %v1801 = vadd.f32 %v1714, %v1800
        %v1802 = vrot.slane %v1801, 2
        %v1803 = vadd.f32 %v1801, %v1802
        %v1804 = vrot.slane %v1803, 1
        %v1805 = vadd.f32 %v1803, %v1804
        %v1806 = vrot.slane %v1715, 4
        %v1807 = vadd.f32 %v1715, %v1806
        %v1808 = vrot.slane %v1807, 2
        %v1809 = vadd.f32 %v1807, %v1808
        %v1810 = vrot.slane %v1809, 1
        %v1811 = vadd.f32 %v1809, %v1810
        %v1812 = vmul.f32 %v1721, 0.125
        %v1813 = vmul.f32 %v1727, 0.125
        %v1814 = vmul.f32 %v1733, 0.125
        %v1815 = vmul.f32 %v1739, 0.125
        %v1816 = vmul.f32 %v1745, 0.125
        %v1817 = vmul.f32 %v1751, 0.125
        %v1818 = vmul.f32 %v1757, 0.125
        %v1819 = vmul.f32 %v1763, 0.125
        %v1820 = vmul.f32 %v1769, 0.125
        %v1821 = vmul.f32 %v1775, 0.125
        %v1822 = vmul.f32 %v1781, 0.125
        %v1823 = vmul.f32 %v1787, 0.125
        %v1824 = vmul.f32 %v1793, 0.125
        %v1825 = vmul.f32 %v1799, 0.125
        %v1826 = vmul.f32 %v1805, 0.125
        %v1827 = vmul.f32 %v1811, 0.125
        %v1828 = vpack.c.bf16 %v1812, %v1812
        %v1829 = vpack.c.bf16 %v1813, %v1813
        %v1830 = vpack.c.bf16 %v1814, %v1814
        %v1831 = vpack.c.bf16 %v1815, %v1815
        %v1832 = vpack.c.bf16 %v1816, %v1816
        %v1833 = vpack.c.bf16 %v1817, %v1817
        %v1834 = vpack.c.bf16 %v1818, %v1818
        %v1835 = vpack.c.bf16 %v1819, %v1819
        %v1836 = vpack.c.bf16 %v1820, %v1820
        %v1837 = vpack.c.bf16 %v1821, %v1821
        %v1838 = vpack.c.bf16 %v1822, %v1822
        %v1839 = vpack.c.bf16 %v1823, %v1823
        %v1840 = vpack.c.bf16 %v1824, %v1824
        %v1841 = vpack.c.bf16 %v1825, %v1825
        %v1842 = vpack.c.bf16 %v1826, %v1826
        %v1843 = vpack.c.bf16 %v1827, %v1827
        %s1844 = scalar_lea.vmem [#allocation8], 128
        %v1845 = vld [vmem:[%s1844] sm:$0xf]
        %v1846 = vld [vmem:[%s1844 + $0x4] sm:$0xf]
        %v1847 = vld [vmem:[%s1844 + $0x8] sm:$0xf]
        %v1848 = vld [vmem:[%s1844 + $0xc] sm:$0xf]
        %v1849 = vld [vmem:[%s1844 + $0x10] sm:$0xf]
        %v1850 = vld [vmem:[%s1844 + $0x14] sm:$0xf]
        %v1851 = vld [vmem:[%s1844 + $0x18] sm:$0xf]
        %v1852 = vld [vmem:[%s1844 + $0x1c] sm:$0xf]
        %v1853 = vld [vmem:[%s1844 + $0x20] sm:$0xf]
        %v1854 = vld [vmem:[%s1844 + $0x24] sm:$0xf]
        %v1855 = vld [vmem:[%s1844 + $0x28] sm:$0xf]
        %v1856 = vld [vmem:[%s1844 + $0x2c] sm:$0xf]
        %v1857 = vld [vmem:[%s1844 + $0x30] sm:$0xf]
        %v1858 = vld [vmem:[%s1844 + $0x34] sm:$0xf]
        %v1859 = vld [vmem:[%s1844 + $0x38] sm:$0xf]
        %v1860 = vld [vmem:[%s1844 + $0x3c] sm:$0xf]
        %s1861 = scalar_lea.vmem %s4, 2
        %v1862 = vld [vmem:[%s1861] sm:$0x1]
        %v1864 = vlaneseq
        %v1865 = vshrl.u32 %v1864, 7
        %v1866 = vsub.s32 0, %v1865
        %v1867 = vrot.slane %v1862, %v1866
        %v1885 = vunpack.c.l.b16 %v1828
        %v1886 = vunpack.c.l.b16 %v1829
        %v1887 = vunpack.c.l.b16 %v1830
        %v1888 = vunpack.c.l.b16 %v1831
        %v1889 = vunpack.c.l.b16 %v1832
        %v1890 = vunpack.c.l.b16 %v1833
        %v1891 = vunpack.c.l.b16 %v1834
        %v1892 = vunpack.c.l.b16 %v1835
        %v1893 = vunpack.c.l.b16 %v1836
        %v1894 = vunpack.c.l.b16 %v1837
        %v1895 = vunpack.c.l.b16 %v1838
        %v1896 = vunpack.c.l.b16 %v1839
        %v1897 = vunpack.c.l.b16 %v1840
        %v1898 = vunpack.c.l.b16 %v1841
        %v1899 = vunpack.c.l.b16 %v1842
        %v1900 = vunpack.c.l.b16 %v1843
        %v1901 = vsel %vm766, %v1886, %v1885
        %v1902 = vsel %vm768, %v1887, %v1901
        %v1903 = vsel %vm770, %v1888, %v1902
        %v1904 = vsel %vm772, %v1889, %v1903
        %v1905 = vsel %vm774, %v1890, %v1904
        %v1906 = vsel %vm776, %v1891, %v1905
        %v1907 = vsel %vm778, %v1892, %v1906
        %v1908 = vsel %vm766, %v1894, %v1893
        %v1909 = vsel %vm768, %v1895, %v1908
        %v1910 = vsel %vm770, %v1896, %v1909
        %v1911 = vsel %vm772, %v1897, %v1910
        %v1912 = vsel %vm774, %v1898, %v1911
        %v1913 = vsel %vm776, %v1899, %v1912
        %v1914 = vsel %vm778, %v1900, %v1913
        %v1915 = vpack.c.b16 %v1914, %v1907
        %v1933 = vunpack.c.l.b16 %v1845
        %v1934 = vunpack.c.l.b16 %v1846
        %v1935 = vunpack.c.l.b16 %v1847
        %v1936 = vunpack.c.l.b16 %v1848
        %v1937 = vunpack.c.l.b16 %v1849
        %v1938 = vunpack.c.l.b16 %v1850
        %v1939 = vunpack.c.l.b16 %v1851
        %v1940 = vunpack.c.l.b16 %v1852
        %v1941 = vunpack.c.l.b16 %v1853
        %v1942 = vunpack.c.l.b16 %v1854
        %v1943 = vunpack.c.l.b16 %v1855
        %v1944 = vunpack.c.l.b16 %v1856
        %v1945 = vunpack.c.l.b16 %v1857
        %v1946 = vunpack.c.l.b16 %v1858
        %v1947 = vunpack.c.l.b16 %v1859
        %v1948 = vunpack.c.l.b16 %v1860
        %v1949 = vpack.c.b16 %v1934, %v1933
        %v1950 = vpack.c.b16 %v1936, %v1935
        %v1951 = vpack.c.b16 %v1938, %v1937
        %v1952 = vpack.c.b16 %v1940, %v1939
        %v1953 = vpack.c.b16 %v1942, %v1941
        %v1954 = vpack.c.b16 %v1944, %v1943
        %v1955 = vpack.c.b16 %v1946, %v1945
        %v1956 = vpack.c.b16 %v1948, %v1947
        %1965 = vmatprep.subr.bf16.mxu0 0
        %1966 = vmatpush1.bf16.msra.mxu0 %v1949
        %1967 = vmatprep.subr.bf16.mxu0 0
        %1968 = vmatpush1.bf16.msra.mxu0 %v1950
        %1969 = vmatprep.subr.bf16.mxu0 0
        %1970 = vmatpush1.bf16.msra.mxu0 %v1951
        %1971 = vmatprep.subr.bf16.mxu0 0
        %1972 = vmatpush1.bf16.msra.mxu0 %v1952
        %1973 = vmatprep.subr.bf16.mxu0 0
        %1974 = vmatpush1.bf16.msra.mxu0 %v1953
        %1975 = vmatprep.subr.bf16.mxu0 0
        %1976 = vmatpush1.bf16.msra.mxu0 %v1954
        %1977 = vmatprep.subr.bf16.mxu0 0
        %1978 = vmatpush1.bf16.msra.mxu0 %v1955
        %1979 = vmatprep.subr.bf16.mxu0 0
        %1980 = vmatpush1.bf16.msra.mxu0 %v1956
        %1981 = vmatprep.subr.bf16.mxu0 0
        %1982 = vmatpush1.bf16.msra.mxu0 0
        %1983 = vmatprep.subr.bf16.mxu0 0
        %1984 = vmatpush1.bf16.msra.mxu0 0
        %1985 = vmatprep.subr.bf16.mxu0 0
        %1986 = vmatpush1.bf16.msra.mxu0 0
        %1987 = vmatprep.subr.bf16.mxu0 0
        %1988 = vmatpush1.bf16.msra.mxu0 0
        %1989 = vmatprep.subr.bf16.mxu0 0
        %1990 = vmatpush1.bf16.msra.mxu0 0
        %1991 = vmatprep.subr.bf16.mxu0 0
        %1992 = vmatpush1.bf16.msra.mxu0 0
        %1993 = vmatprep.subr.bf16.mxu0 0
        %1994 = vmatpush1.bf16.msra.mxu0 0
        %1995 = vmatprep.subr.bf16.mxu0 0
        %1996 = vmatpush1.bf16.msra.mxu0 0
        %1997 = vmatprep.mubr.bf16.mxu0 0
        %1998 = vmatmul.mubr.bf16.gmra.mrb[0].mxu0 %v1915
        %v1999 = vpop.f32.mrb[0].mxu0
        %v2000 = vadd.f32 %v1867, %v1999
        %v2001 = vpop.f32.mrb[0].mxu0
        %v2002 = vpop.f32.mrb[0].mxu0
        %v2003 = vadd.f32 %v1867, %v2002
        %v2004 = vpop.f32.mrb[0].mxu0
        %2005 = vdwg.mxu0
        %v2006 = vmax.f32 %v2000, 0.0
        %v2007 = vmax.f32 %v2003, 0.0
        %v2008 = vpack.c.bf16 %v2007, %v2006
        %s2009 = scalar_lea.vmem [#allocation10], 128
        %v2010 = vld [vmem:[%s2009] sm:$0xf]
        %v2011 = vld [vmem:[%s2009 + $0x4] sm:$0xf]
        %v2012 = vld [vmem:[%s2009 + $0x8] sm:$0xf]
        %v2013 = vld [vmem:[%s2009 + $0xc] sm:$0xf]
        %v2014 = vld [vmem:[%s2009 + $0x10] sm:$0xf]
        %v2015 = vld [vmem:[%s2009 + $0x14] sm:$0xf]
        %v2016 = vld [vmem:[%s2009 + $0x18] sm:$0xf]
        %v2017 = vld [vmem:[%s2009 + $0x1c] sm:$0xf]
        %v2018 = vld [vmem:[%s2009 + $0x20] sm:$0xf]
        %v2019 = vld [vmem:[%s2009 + $0x24] sm:$0xf]
        %v2020 = vld [vmem:[%s2009 + $0x28] sm:$0xf]
        %v2021 = vld [vmem:[%s2009 + $0x2c] sm:$0xf]
        %v2022 = vld [vmem:[%s2009 + $0x30] sm:$0xf]
        %v2023 = vld [vmem:[%s2009 + $0x34] sm:$0xf]
        %v2024 = vld [vmem:[%s2009 + $0x38] sm:$0xf]
        %v2025 = vld [vmem:[%s2009 + $0x3c] sm:$0xf]
        %s2026 = scalar_lea.vmem %s6, 2
        %v2027 = vld [vmem:[%s2026] sm:$0x1]
        %v2029 = vlaneseq
        %v2030 = vshrl.u32 %v2029, 7
        %v2031 = vsub.s32 0, %v2030
        %v2032 = vrot.slane %v2027, %v2031
        %v2050 = vunpack.c.l.b16 %v2010
        %v2051 = vunpack.c.l.b16 %v2011
        %v2052 = vunpack.c.l.b16 %v2012
        %v2053 = vunpack.c.l.b16 %v2013
        %v2054 = vunpack.c.l.b16 %v2014
        %v2055 = vunpack.c.l.b16 %v2015
        %v2056 = vunpack.c.l.b16 %v2016
        %v2057 = vunpack.c.l.b16 %v2017
        %v2058 = vunpack.c.l.b16 %v2018
        %v2059 = vunpack.c.l.b16 %v2019
        %v2060 = vunpack.c.l.b16 %v2020
        %v2061 = vunpack.c.l.b16 %v2021
        %v2062 = vunpack.c.l.b16 %v2022
        %v2063 = vunpack.c.l.b16 %v2023
        %v2064 = vunpack.c.l.b16 %v2024
        %v2065 = vunpack.c.l.b16 %v2025
        %v2066 = vpack.c.b16 %v2051, %v2050
        %v2067 = vpack.c.b16 %v2053, %v2052
        %v2068 = vpack.c.b16 %v2055, %v2054
        %v2069 = vpack.c.b16 %v2057, %v2056
        %v2070 = vpack.c.b16 %v2059, %v2058
        %v2071 = vpack.c.b16 %v2061, %v2060
        %v2072 = vpack.c.b16 %v2063, %v2062
        %v2073 = vpack.c.b16 %v2065, %v2064
        %2082 = vmatprep.subr.bf16.mxu0 0
        %2083 = vmatpush1.bf16.msra.mxu0 %v2066
        %2084 = vmatprep.subr.bf16.mxu0 0
        %2085 = vmatpush1.bf16.msra.mxu0 %v2067
        %2086 = vmatprep.subr.bf16.mxu0 0
        %2087 = vmatpush1.bf16.msra.mxu0 %v2068
        %2088 = vmatprep.subr.bf16.mxu0 0
        %2089 = vmatpush1.bf16.msra.mxu0 %v2069
        %2090 = vmatprep.subr.bf16.mxu0 0
        %2091 = vmatpush1.bf16.msra.mxu0 %v2070
        %2092 = vmatprep.subr.bf16.mxu0 0
        %2093 = vmatpush1.bf16.msra.mxu0 %v2071
        %2094 = vmatprep.subr.bf16.mxu0 0
        %2095 = vmatpush1.bf16.msra.mxu0 %v2072
        %2096 = vmatprep.subr.bf16.mxu0 0
        %2097 = vmatpush1.bf16.msra.mxu0 %v2073
        %2098 = vmatprep.subr.bf16.mxu0 0
        %2099 = vmatpush1.bf16.msra.mxu0 0
        %2100 = vmatprep.subr.bf16.mxu0 0
        %2101 = vmatpush1.bf16.msra.mxu0 0
        %2102 = vmatprep.subr.bf16.mxu0 0
        %2103 = vmatpush1.bf16.msra.mxu0 0
        %2104 = vmatprep.subr.bf16.mxu0 0
        %2105 = vmatpush1.bf16.msra.mxu0 0
        %2106 = vmatprep.subr.bf16.mxu0 0
        %2107 = vmatpush1.bf16.msra.mxu0 0
        %2108 = vmatprep.subr.bf16.mxu0 0
        %2109 = vmatpush1.bf16.msra.mxu0 0
        %2110 = vmatprep.subr.bf16.mxu0 0
        %2111 = vmatpush1.bf16.msra.mxu0 0
        %2112 = vmatprep.subr.bf16.mxu0 0
        %2113 = vmatpush1.bf16.msra.mxu0 0
        %2114 = vmatprep.mubr.bf16.mxu0 0
        %2115 = vmatmul.mubr.bf16.gmra.mrb[0].mxu0 %v2008
        %v2116 = vpop.f32.mrb[0].mxu0
        %v2117 = vadd.f32 %v2032, %v2116
        %v2118 = vpop.f32.mrb[0].mxu0
        %v2119 = vpop.f32.mrb[0].mxu0
        %v2120 = vadd.f32 %v2032, %v2119
        %v2121 = vpop.f32.mrb[0].mxu0
        %2122 = vdwg.mxu0
        %v2123 = vmax.f32 %v2117, 0.0
        %v2124 = vmax.f32 %v2120, 0.0
        %v2125 = vpack.c.bf16 %v2124, %v2123
        %s2126 = scalar_lea.vmem [#allocation11], 128
        %v2127 = vld [vmem:[%s2126] sm:$0xf]
        %v2128 = vld [vmem:[%s2126 + $0x4] sm:$0xf]
        %v2129 = vld [vmem:[%s2126 + $0x8] sm:$0xf]
        %v2130 = vld [vmem:[%s2126 + $0xc] sm:$0xf]
        %v2131 = vld [vmem:[%s2126 + $0x10] sm:$0xf]
        %v2132 = vld [vmem:[%s2126 + $0x14] sm:$0xf]
        %v2133 = vld [vmem:[%s2126 + $0x18] sm:$0xf]
        %v2134 = vld [vmem:[%s2126 + $0x1c] sm:$0xf]
        %v2135 = vld [vmem:[%s2126 + $0x20] sm:$0xf]
        %v2136 = vld [vmem:[%s2126 + $0x24] sm:$0xf]
        %v2137 = vld [vmem:[%s2126 + $0x28] sm:$0xf]
        %v2138 = vld [vmem:[%s2126 + $0x2c] sm:$0xf]
        %v2139 = vld [vmem:[%s2126 + $0x30] sm:$0xf]
        %v2140 = vld [vmem:[%s2126 + $0x34] sm:$0xf]
        %v2141 = vld [vmem:[%s2126 + $0x38] sm:$0xf]
        %v2142 = vld [vmem:[%s2126 + $0x3c] sm:$0xf]
        %s2143 = scalar_lea.vmem %s8, 2
        %v2144 = vld [vmem:[%s2143] sm:$0x1]
        %v2146 = vlaneseq
        %v2147 = vshrl.u32 %v2146, 7
        %v2148 = vsub.s32 0, %v2147
        %v2149 = vrot.slane %v2144, %v2148
        %v2167 = vunpack.c.l.b16 %v2127
        %v2168 = vunpack.c.l.b16 %v2128
        %v2169 = vunpack.c.l.b16 %v2129
        %v2170 = vunpack.c.l.b16 %v2130
        %v2171 = vunpack.c.l.b16 %v2131
        %v2172 = vunpack.c.l.b16 %v2132
        %v2173 = vunpack.c.l.b16 %v2133
        %v2174 = vunpack.c.l.b16 %v2134
        %v2175 = vunpack.c.l.b16 %v2135
        %v2176 = vunpack.c.l.b16 %v2136
        %v2177 = vunpack.c.l.b16 %v2137
        %v2178 = vunpack.c.l.b16 %v2138
        %v2179 = vunpack.c.l.b16 %v2139
        %v2180 = vunpack.c.l.b16 %v2140
        %v2181 = vunpack.c.l.b16 %v2141
        %v2182 = vunpack.c.l.b16 %v2142
        %v2183 = vpack.c.b16 %v2168, %v2167
        %v2184 = vpack.c.b16 %v2170, %v2169
        %v2185 = vpack.c.b16 %v2172, %v2171
        %v2186 = vpack.c.b16 %v2174, %v2173
        %v2187 = vpack.c.b16 %v2176, %v2175
        %v2188 = vpack.c.b16 %v2178, %v2177
        %v2189 = vpack.c.b16 %v2180, %v2179
        %v2190 = vpack.c.b16 %v2182, %v2181
        %2199 = vmatprep.subr.bf16.mxu0 0
        %2200 = vmatpush1.bf16.msra.mxu0 %v2183
        %2201 = vmatprep.subr.bf16.mxu0 0
        %2202 = vmatpush1.bf16.msra.mxu0 %v2184
        %2203 = vmatprep.subr.bf16.mxu0 0
        %2204 = vmatpush1.bf16.msra.mxu0 %v2185
        %2205 = vmatprep.subr.bf16.mxu0 0
        %2206 = vmatpush1.bf16.msra.mxu0 %v2186
        %2207 = vmatprep.subr.bf16.mxu0 0
        %2208 = vmatpush1.bf16.msra.mxu0 %v2187
        %2209 = vmatprep.subr.bf16.mxu0 0
        %2210 = vmatpush1.bf16.msra.mxu0 %v2188
        %2211 = vmatprep.subr.bf16.mxu0 0
        %2212 = vmatpush1.bf16.msra.mxu0 %v2189
        %2213 = vmatprep.subr.bf16.mxu0 0
        %2214 = vmatpush1.bf16.msra.mxu0 %v2190
        %2215 = vmatprep.subr.bf16.mxu0 0
        %2216 = vmatpush1.bf16.msra.mxu0 0
        %2217 = vmatprep.subr.bf16.mxu0 0
        %2218 = vmatpush1.bf16.msra.mxu0 0
        %2219 = vmatprep.subr.bf16.mxu0 0
        %2220 = vmatpush1.bf16.msra.mxu0 0
        %2221 = vmatprep.subr.bf16.mxu0 0
        %2222 = vmatpush1.bf16.msra.mxu0 0
        %2223 = vmatprep.subr.bf16.mxu0 0
        %2224 = vmatpush1.bf16.msra.mxu0 0
        %2225 = vmatprep.subr.bf16.mxu0 0
        %2226 = vmatpush1.bf16.msra.mxu0 0
        %2227 = vmatprep.subr.bf16.mxu0 0
        %2228 = vmatpush1.bf16.msra.mxu0 0
        %2229 = vmatprep.subr.bf16.mxu0 0
        %2230 = vmatpush1.bf16.msra.mxu0 0
        %2231 = vmatprep.mubr.bf16.mxu0 0
        %2232 = vmatmul.mubr.bf16.gmra.mrb[0].mxu0 %v2125
        %v2233 = vpop.f32.mrb[0].mxu0
        %v2234 = vadd.f32 %v2149, %v2233
        %v2235 = vpop.f32.mrb[0].mxu0
        %v2236 = vpop.f32.mrb[0].mxu0
        %v2237 = vadd.f32 %v2149, %v2236
        %v2238 = vpop.f32.mrb[0].mxu0
        %2239 = vdwg.mxu0
        %v2240 = vpack.c.bf16 %v2237, %v2234
        %v2242 = vunpack.c.l.b16 %v2240
        %v2243 = vunpack.c.h.b16 %v2240
        %v2244 = vpack.c.b16 %v2242, %v2242
        %v2245 = vpack.c.b16 %v2243, %v2243
        %2248 = vst [vmem:[%s543] sm:$0xf] %v2244
        %2249 = vst [vmem:[%s543 + $0x4] sm:$0xf] %v2245
        %s2250 = sand.u32 %s249, 1
        %s2251 = scalar_lea.sflag [#allocation4], %s2250
        %s2252 = sand.u32 %s249, 1
        %s2253 = smul.addr %s2252, 8
        %s2254 = scalar_lea.vmem [#allocation13], %s2253
        %s2255 = sand.u32 %s37, 1
        %s2256 = scalar_lea.sflag [#allocation15], %s2255
        %s2257 = sand.u32 %s275, 1
        %s2258 = smul.addr %s2257, 8
        %s2259 = scalar_lea.vmem [#allocation14], %s2258
        %s2260 = sand.u32 %s37, 1
        %s2261 = scalar_lea.sflag [#allocation15], %s2260
        %s2262 = sand.u32 %s301, 1
        %s2263 = smul.addr %s2262, 8
        %s2264 = scalar_lea.vmem [#allocation16], %s2263
        // Predicated region
        $region81: #{tpu_custom_call.1} parent=55 // pred_check
          %p2265 = pneg %p259
        $region82: #{tpu_custom_call.1} parent=55 // pred_check_branch
          %2267 = sbr.rel (%p2265) target = $region84
        $region83: #{tpu_custom_call.1} parent=55 // pred_region
          %s2268 = smul.u32 2, %s37
          %s2270 = ssub.s32 128, 128
          %2271 = vsyncadd %s2251, %s2270
          %s2272 = smul.addr %s2268, 64
          %s2273 = scalar_lea.hbm %s9, %s2272
          %s2274 = sshll.u32 %s2254, 4
          %s2275 = int_to_ptr.vmem [resolvable:$true] %s2274
          %2280 = dma.vmem_to_hbm [thread:$0]  %s2275, 128, %s2273, %s2251, 64, 64, 4
        $region84: #{tpu_custom_call.1} parent=55 // pred_fallthru
          _
        // Predicated region
        $region85: #{tpu_custom_call.1} parent=55 // pred_check
          %p2281 = pneg %p285
        $region86: #{tpu_custom_call.1} parent=55 // pred_check_branch
          %2283 = sbr.rel (%p2281) target = $region88
        $region87: #{tpu_custom_call.1} parent=55 // pred_region
          %s2284 = smul.u32 2, %s37
          %s2286 = ssub.s32 128, 128
          %2287 = vsyncadd %s2256, %s2286
          %s2288 = smul.addr %s2284, 64
          %s2289 = scalar_lea.hbm %s10, %s2288
          %s2290 = sshll.u32 %s2259, 4
          %s2291 = int_to_ptr.vmem [resolvable:$true] %s2290
          %2296 = dma.vmem_to_hbm [thread:$0]  %s2291, 128, %s2289, %s2256, 64, 64, 4
        $region88: #{tpu_custom_call.1} parent=55 // pred_fallthru
          _
        // Predicated region
        $region89: #{tpu_custom_call.1} parent=55 // pred_check
          %p2297 = pneg %p311
        $region90: #{tpu_custom_call.1} parent=55 // pred_check_branch
          %2299 = sbr.rel (%p2297) target = $region92
        $region91: #{tpu_custom_call.1} parent=55 // pred_region
          %s2300 = smul.u32 2, %s37
          %s2302 = ssub.s32 128, 128
          %2303 = vsyncadd %s2261, %s2302
          %s2304 = smul.addr %s2300, 64
          %s2305 = scalar_lea.hbm %s11, %s2304
          %s2306 = sshll.u32 %s2264, 4
          %s2307 = int_to_ptr.vmem [resolvable:$true] %s2306
          %2312 = dma.vmem_to_hbm [thread:$0]  %s2307, 128, %s2305, %s2261, 64, 64, 4
        $region92: #{tpu_custom_call.1} parent=55 // pred_fallthru
          _
      $region56: #{tpu_custom_call.1} parent=5 // pred_fallthru
        _
      %p2313 = scmp.le.s32.totalorder 2, %s32
      // Predicated region
      $region93: #{tpu_custom_call.1} parent=5 // pred_check
        %p2314 = pneg %p2313
      $region94: #{tpu_custom_call.1} parent=5 // pred_check_branch
        %2316 = sbr.rel (%p2314) target = $region96
      $region95: #{tpu_custom_call.1} parent=5 // pred_region
        %s2317 = ssub.s32 %s32, 2
        // Predicated region
        $region97: #{tpu_custom_call.1} parent=95 // pred_check
          %p2318 = pneg %p265
        $region98: #{tpu_custom_call.1} parent=95 // pred_check_branch
          %2320 = sbr.rel (%p2318) target = $region100
        $region99: #{tpu_custom_call.1} parent=95 // pred_region
          %s2321 = sand.u32 %s250, 1
          %s2322 = scalar_lea.sflag [#allocation4], %s2321
          %s2323 = sand.u32 %s250, 1
          %s2324 = smul.addr %s2323, 8
          %s2325 = scalar_lea.vmem [#allocation13], %s2324
          %2326 = dma.done %s2322, 128
        $region100: #{tpu_custom_call.1} parent=95 // pred_fallthru
          _
        // Predicated region
        $region101: #{tpu_custom_call.1} parent=95 // pred_check
          %p2327 = pneg %p291
        $region102: #{tpu_custom_call.1} parent=95 // pred_check_branch
          %2329 = sbr.rel (%p2327) target = $region104
        $region103: #{tpu_custom_call.1} parent=95 // pred_region
          %s2330 = sand.u32 %s38, 1
          %s2331 = scalar_lea.sflag [#allocation15], %s2330
          %s2332 = sand.u32 %s276, 1
          %s2333 = smul.addr %s2332, 8
          %s2334 = scalar_lea.vmem [#allocation14], %s2333
          %2335 = dma.done %s2331, 128
        $region104: #{tpu_custom_call.1} parent=95 // pred_fallthru
          _
        // Predicated region
        $region105: #{tpu_custom_call.1} parent=95 // pred_check
          %p2336 = pneg %p317
        $region106: #{tpu_custom_call.1} parent=95 // pred_check_branch
          %2338 = sbr.rel (%p2336) target = $region108
        $region107: #{tpu_custom_call.1} parent=95 // pred_region
          %s2339 = sand.u32 %s38, 1
          %s2340 = scalar_lea.sflag [#allocation15], %s2339
          %s2341 = sand.u32 %s302, 1
          %s2342 = smul.addr %s2341, 8
          %s2343 = scalar_lea.vmem [#allocation16], %s2342
          %2344 = dma.done %s2340, 128
        $region108: #{tpu_custom_call.1} parent=95 // pred_fallthru
          _
      $region96: #{tpu_custom_call.1} parent=5 // pred_fallthru
        _
    $region6: #{tpu_custom_call.1} parent=1 // loop_footer
      %s36 = sadd.s32 1, %s32
    $region7: #{tpu_custom_call.1} parent=1 // loop_footer_branch
      %31 = sbr.rel target = $region3
    $region8: #{tpu_custom_call.1} parent=1 // loop_exit
      _
    %2345 = vsyncpa [#allocation3], 1
    %s2346 = scalar_lea.sflag [#allocation3], 1
    %2347 = vsyncpa %s2346, 1
    %2348 = vsyncpa [#allocation6], 1
    %s2349 = scalar_lea.sflag [#allocation6], 1
    %2350 = vsyncpa %s2349, 1
    %2351 = vsyncpa [#allocation9], 1
    %2352 = vsyncpa [#allocation12], 1
    %2353 = vsyncpa [#allocation4], 1
    %s2354 = scalar_lea.sflag [#allocation4], 1
    %2355 = vsyncpa %s2354, 1
    %2356 = vsyncpa [#allocation15], 1
    %s2357 = scalar_lea.sflag [#allocation15], 1
    %2358 = vsyncpa %s2357, 1

</llo_original>
